<compile_context>
chip_gen: v5e
topology: v5e:2x2
jax: 0.10.0
libtpu: 0.0.40
codegen_flags: <defaults>
</compile_context>

<pallas_src>
import functools

import jax
import jax.numpy as jnp
import numpy as np
from jax.experimental import pallas as pl
from jax.experimental.pallas import tpu as pltpu


# ----------------------------------------------------------------------------
# Pallas kernel: WB windows of multi-head window attention per grid step.
# ----------------------------------------------------------------------------
def _window_attn_kernel(x_ref, wqkv_ref, bqkv_ref, wproj_ref, bproj_ref,
                        bm_ref, o_ref, *, wb, n_tokens, n_heads, head_dim,
                        approx_recip):
    N, H, Dh = n_tokens, n_heads, head_dim
    C = H * Dh
    rows = wb * N
    f32, bf16 = jnp.float32, jnp.bfloat16

    # ---- QKV projection: one big MXU matmul, M = WB*N rows --------------------
    x2d = x_ref[...].reshape(rows, C)                       # (rows, C) bf16
    qkv = jnp.dot(x2d, wqkv_ref[...], preferred_element_type=f32)
    qkv = (qkv + bqkv_ref[...]).astype(bf16)                # (rows, 3C) bf16
    # NOTE: 1/sqrt(Dh) is already folded into the Q columns of wqkv/bqkv.

    # ---- per-head attention core + output projection accumulated over heads ---
    acc = jnp.zeros((rows, C), f32)
    for h in range(H):                                      # unrolled (H is small)
        q_h = qkv[:, h * Dh:(h + 1) * Dh].reshape(wb, N, Dh)
        k_h = qkv[:, C + h * Dh:C + (h + 1) * Dh].reshape(wb, N, Dh)
        v_h = qkv[:, 2 * C + h * Dh:2 * C + (h + 1) * Dh].reshape(wb, N, Dh)

        # scores, window-batched on the MXU
        s = jnp.einsum("bnd,bmd->bnm", q_h, k_h,
                       preferred_element_type=f32)          # (wb, N, N) f32
        # single pre-combined (rel-pos bias + shifted-window mask) add
        s = s + bm_ref[h].astype(f32)                       # (wb|1, N, N)

        # numerically-stable softmax in f32
        s = s - jnp.max(s, axis=-1, keepdims=True)
        e = jnp.exp(s)
        denom = jnp.sum(e, axis=-1, keepdims=True)
        if approx_recip:
            p = e * pl.reciprocal(denom, approx=True)       # EUP slot
        else:
            p = e / denom
        p = jnp.maximum(p, 1e-8)                            # torch.clamp(min=1e-8)
        # TODO(synk): attn_drop / proj_drop are identity here (drop prob = 0.0).

        o_h = jnp.einsum("bnm,bmd->bnd", p.astype(bf16), v_h,
                         preferred_element_type=f32)        # (wb, N, Dh) f32

        # output projection: per-head partial, accumulated into one f32 buffer
        acc = acc + jnp.dot(o_h.reshape(rows, Dh).astype(bf16), wproj_ref[h],
                            preferred_element_type=f32)     # (rows, C)

    y = acc + bproj_ref[...]
    o_ref[...] = y.reshape(wb, N, C).astype(o_ref.dtype)


# ----------------------------------------------------------------------------
# Host-side helpers.
# ----------------------------------------------------------------------------
@functools.lru_cache(maxsize=None)
def _relative_position_index(window_size):
    """Cached Swin relative-position index, shape (N, N) (host-side numpy)."""
    Wh, Ww = window_size
    coords = np.stack(np.meshgrid(np.arange(Wh), np.arange(Ww), indexing="ij"))
    cf = coords.reshape(2, -1)
    rel = (cf[:, :, None] - cf[:, None, :]).transpose(1, 2, 0).astype(np.int64)
    rel[:, :, 0] += Wh - 1
    rel[:, :, 1] += Ww - 1
    rel[:, :, 0] *= 2 * Ww - 1
    return rel.sum(-1)


def make_relative_position_bias(rpb_table, window_size, n_heads,
                                dtype=jnp.float32):
    """Gather the (H, N, N) relative-position bias once, outside the kernel."""
    Wh, Ww = window_size
    N = Wh * Ww
    idx = jnp.asarray(_relative_position_index(tuple(window_size)).reshape(-1))
    bias = rpb_table[idx].reshape(N, N, n_heads).transpose(2, 0, 1)
    return bias.astype(dtype)


def _estimate_step_bytes(wb, N, C, H, mask_blk_wb, out_itemsize):
    """Rough per-grid-step VMEM working-set estimate (double-buffered tiles,
    resident weights/bias, and the live f32/bf16 intermediates)."""
    rows = wb * N
    dh = C // H
    x_b = 2 * rows * C * 2                              # input tile, bf16, 2 bufs
    o_b = 2 * rows * C * out_itemsize                   # output tile, 2 bufs
    w_b = 2 * (C * 3 * C * 2 + H * dh * C * 2) + 4 * (3 * C + C)
    bm_b = 2 * H * mask_blk_wb * N * N * 2              # bias(+mask), bf16
    inter = (rows * 3 * C * (4 + 2)                     # qkv f32 + bf16
             + rows * C * 4                             # f32 accumulator
             + 3 * wb * N * N * 4                       # scores / exp / probs f32
             + rows * dh * 4)                           # per-head attention out
    return x_b + o_b + w_b + bm_b + inter


def _choose_window_block(B_, N, C, H, nW, out_itemsize, has_mask,
                         vmem_budget=24 << 20, max_rows=1024):
    """Windows per grid step: largest block that (a) divides B_, (b) keeps the
    mask tiling expressible through the BlockSpec index_map, (c) fits the VMEM
    budget and row cap; prefer >= 2 grid steps (v7x has 2 TensorCores) when it
    does not cost more than half the block size."""
    cands = [wb for wb in range(1, B_ + 1)
             if B_ % wb == 0
             and (wb % nW == 0 or nW % wb == 0)
             and wb * N <= max_rows
             and _estimate_step_bytes(wb, N, C, H, wb if has_mask else 1,
                                      out_itemsize) <= vmem_budget]
    if not cands:
        return 1                                        # always-valid fallback
    best = max(cands)
    multi = [wb for wb in cands if B_ // wb >= 2]
    if multi and 2 * max(multi) >= best:
        return max(multi)
    return best


# ----------------------------------------------------------------------------
# Wrapper: weight re-layout, scale folding, bias+mask pre-combine, pallas_call.
# ----------------------------------------------------------------------------
def window_attention(x, params, window_size, n_heads, mask=None, rel_bias=None,
                     approx_recip=True):
    B_, N, C = x.shape
    Wh, Ww = window_size
    assert N == Wh * Ww and C % n_heads == 0
    head_dim = C // n_heads
    scale = head_dim ** (-0.5)
    out_dtype = x.dtype
    out_itemsize = jnp.dtype(out_dtype).itemsize

    # (H, N, N) relative-position bias: gathered once, reused every forward.
    if rel_bias is None:
        rel_bias = make_relative_position_bias(params["rpb_table"], window_size,
                                               n_heads, dtype=jnp.float32)
    rel_bias = rel_bias.astype(jnp.float32)

    nW = 1 if mask is None else mask.shape[0]
    assert B_ % nW == 0
    WB = _choose_window_block(B_, N, C, n_heads, nW, out_itemsize,
                              mask is not None)
    n_steps = B_ // WB

    # Pre-combined (bias + mask) so the kernel does a single add.
    if mask is None:
        bm = rel_bias[:, None].astype(jnp.bfloat16)            # (H, 1, N, N)
        bm_block = (n_heads, 1, N, N)
        bm_index = lambda i: (0, 0, 0, 0)
    else:
        combo = rel_bias[:, None] + mask[None].astype(jnp.float32)  # (H, nW, N, N)
        if WB % nW == 0:
            bm = jnp.tile(combo, (1, WB // nW, 1, 1)).astype(jnp.bfloat16)
            bm_index = lambda i: (0, 0, 0, 0)
        else:  # nW % WB == 0 (guaranteed by _choose_window_block)
            period = nW // WB
            bm = combo.astype(jnp.bfloat16)
            bm_index = lambda i: (0, i % period, 0, 0)
        bm_block = (n_heads, WB, N, N)

    # bf16 MXU operands; 1/sqrt(Dh) folded into the Q columns of wqkv/bqkv.
    w_qkv = params["wqkv"].at[:, :C].multiply(scale).astype(jnp.bfloat16)  # (C,3C)
    b_qkv = (params["bqkv"].at[:C].multiply(scale)
             .reshape(1, 3 * C).astype(jnp.float32))
    w_proj = params["wproj"].reshape(n_heads, head_dim, C).astype(jnp.bfloat16)
    b_proj = params["bproj"].reshape(1, C).astype(jnp.float32)
    x_bf = x.astype(jnp.bfloat16)

    kernel = functools.partial(_window_attn_kernel, wb=WB, n_tokens=N,
                               n_heads=n_heads, head_dim=head_dim,
                               approx_recip=approx_recip)

    # VMEM limit derived from the per-step working set (kept <= 48 MiB so it
    # is safe on v7x's 64 MiB physical VMEM as well as v5e/v6e).
    est = _estimate_step_bytes(WB, N, C, n_heads, WB if mask is not None else 1,
                               out_itemsize)
    vmem_limit = int(min(48 << 20, max(32 << 20, 2 * est)))

    flops = B_ * (2 * N * C * 3 * C      # qkv projection
                  + 2 * N * N * C        # scores (summed over heads)
                  + 2 * N * N * C        # probs @ v
                  + 2 * N * C * C)       # output projection
    bytes_accessed = (B_ * N * C * (2 + out_itemsize)
                      + n_steps * (w_qkv.size * 2 + w_proj.size * 2
                                   + b_qkv.size * 4 + b_proj.size * 4
                                   + bm.size * 2))
    cost = pl.CostEstimate(flops=int(flops),
                           transcendentals=int(B_ * n_heads * N * N),
                           bytes_accessed=int(bytes_accessed))

    # NOTE: the weight / bias / bias+mask operands have constant index_maps; on
    # a VMEM-tight v7x config they could additionally be single-buffered via
    # pipeline_mode=pl.Buffered(1), which is unnecessary at these sizes.
    out = pl.pallas_call(
        kernel,
        out_shape=jax.ShapeDtypeStruct((B_, N, C), out_dtype),
        grid=(n_steps,),
        in_specs=[
            pl.BlockSpec((WB, N, C), lambda i: (i, 0, 0)),                 # x
            pl.BlockSpec((C, 3 * C), lambda i: (0, 0)),                    # Wqkv
            pl.BlockSpec((1, 3 * C), lambda i: (0, 0)),                    # bqkv
            pl.BlockSpec((n_heads, head_dim, C), lambda i: (0, 0, 0)),     # Wproj
            pl.BlockSpec((1, C), lambda i: (0, 0)),                        # bproj
            pl.BlockSpec(bm_block, bm_index),                              # bias(+mask)
        ],
        out_specs=pl.BlockSpec((WB, N, C), lambda i: (i, 0, 0)),
        compiler_params=pltpu.CompilerParams(
            dimension_semantics=("parallel",),
            vmem_limit_bytes=vmem_limit),
        cost_estimate=cost,
    )(x_bf, w_qkv, b_qkv, w_proj, b_proj, bm)
    return out


# ----------------------------------------------------------------------------
# Pure-JAX reference (mirrors the PyTorch forward), used for verification.
# ----------------------------------------------------------------------------
def window_attention_ref(x, params, window_size, n_heads, mask=None):
    B_, N, C = x.shape
    head_dim = C // n_heads
    scale = head_dim ** (-0.5)

    qkv = x @ params["wqkv"] + params["bqkv"]                             # (B_, N, 3C)
    qkv = qkv.reshape(B_, N, 3, n_heads, head_dim).transpose(2, 0, 3, 1, 4)
    q, k, v = qkv[0], qkv[1], qkv[2]                                      # (B_, H, N, Dh)
    q = q * scale
    attn = jnp.einsum("bhnd,bhmd->bhnm", q, k)

    bias = make_relative_position_bias(params["rpb_table"], window_size,
                                       n_heads, dtype=jnp.float32)
    attn = attn + bias[None]

    if mask is not None:
        nW = mask.shape[0]
        attn = attn.reshape(B_ // nW, nW, n_heads, N, N) + mask[None, :, None]
        attn = attn.reshape(-1, n_heads, N, N)

    attn = jax.nn.softmax(attn, axis=-1)
    attn = jnp.maximum(attn, 1e-8)
    out = jnp.einsum("bhnm,bhmd->bhnd", attn, v).transpose(0, 2, 1, 3).reshape(B_, N, C)
    return out @ params["wproj"] + params["bproj"]


def init_params(key, dim, window_size, n_heads):
    Wh, Ww = window_size
    k1, k2, k3 = jax.random.split(key, 3)

    def trunc_normal(k, shape, std=0.02):
        return std * jax.random.truncated_normal(k, -2.0, 2.0, shape, jnp.float32)

    return {
        # stored as (in, out) so the kernel does x @ W (equiv. to torch x @ W.T)
        "wqkv": trunc_normal(k1, (dim, 3 * dim)),
        "bqkv": jnp.zeros((3 * dim,), jnp.float32),
        "wproj": trunc_normal(k2, (dim, dim)),
        "bproj": jnp.zeros((dim,), jnp.float32),
        "rpb_table": trunc_normal(k3, ((2 * Wh - 1) * (2 * Ww - 1), n_heads)),
    }


if __name__ == "__main__":
    # Small, module-consistent shapes.
    dim = 32
    n_heads = 4
    window_size = (8, 8)
    N = window_size[0] * window_size[1]      # 64 tokens per window
    batch = 2
    nW = 2                                   # number of (shifted) windows per image
    B_ = batch * nW                          # 4 windows total

    key = jax.random.PRNGKey(0)
    kx, km, kp = jax.random.split(key, 3)

    x = jax.random.normal(kx, (B_, N, dim), jnp.float32)
    # Shifted-window attention mask: 0 / -100 blocks, like Swin.
    mask_bits = jax.random.bernoulli(km, 0.2, (nW, N, N))
    mask = jnp.where(mask_bits, -100.0, 0.0).astype(jnp.float32)

    params = init_params(kp, dim, window_size, n_heads)
    # relative-position bias gathered ONCE (init-time), reused every forward
    rel_bias = make_relative_position_bias(params["rpb_table"], window_size,
                                           n_heads)

    # --- masked (SW-MSA) path ---
    out = window_attention(x, params, window_size, n_heads, mask=mask,
                           rel_bias=rel_bias)
    out = jax.block_until_ready(out)
    ref = window_attention_ref(x, params, window_size, n_heads, mask=mask)
    # bf16 MXU operands + approx EUP reciprocal -> looser tolerance than f32 ref.
    np.testing.assert_allclose(np.asarray(out), np.asarray(ref),
                               rtol=5e-2, atol=1e-3)

    # --- unmasked (W-MSA) path (mask input specialized away) ---
    out_nm = window_attention(x, params, window_size, n_heads, mask=None,
                              rel_bias=rel_bias)
    out_nm = jax.block_until_ready(out_nm)
    ref_nm = window_attention_ref(x, params, window_size, n_heads, mask=None)
    np.testing.assert_allclose(np.asarray(out_nm), np.asarray(ref_nm),
                               rtol=5e-2, atol=1e-3)

    print("KERNEL_OK")
</pallas_src>

<mosaic_0001>
module attributes {stable_mosaic.version = 11 : i64} {
  func.func @_window_attn_kernel(%arg0: i32, %arg1: memref<2x64x32xbf16, #tpu.memory_space<vmem>>, %arg2: memref<32x96xbf16, #tpu.memory_space<vmem>>, %arg3: memref<1x96xf32, #tpu.memory_space<vmem>>, %arg4: memref<4x8x32xbf16, #tpu.memory_space<vmem>>, %arg5: memref<1x32xf32, #tpu.memory_space<vmem>>, %arg6: memref<4x2x64x64xbf16, #tpu.memory_space<vmem>>, %arg7: memref<2x64x32xf32, #tpu.memory_space<vmem>>) attributes {dimension_semantics = [#tpu.dimension_semantics<parallel>], iteration_bounds = array<i64: 2>, scalar_prefetch = 0 : i64, scratch_operands = 0 : i64, tpu.core_type = #tpu.core_type<tc>, window_params = [{transform_indices = @transform_0, window_bounds = array<i64: 2, 64, 32>}, {pipeline_mode = #tpu.pipeline_mode<synchronous>, transform_indices = @transform_1, window_bounds = array<i64: 32, 96>}, {pipeline_mode = #tpu.pipeline_mode<synchronous>, transform_indices = @transform_2, window_bounds = array<i64: 1, 96>}, {pipeline_mode = #tpu.pipeline_mode<synchronous>, transform_indices = @transform_3, window_bounds = array<i64: 4, 8, 32>}, {pipeline_mode = #tpu.pipeline_mode<synchronous>, transform_indices = @transform_4, window_bounds = array<i64: 1, 32>}, {pipeline_mode = #tpu.pipeline_mode<synchronous>, transform_indices = @transform_5, window_bounds = array<i64: 4, 2, 64, 64>}, {transform_indices = @transform_6, window_bounds = array<i64: 2, 64, 32>}]} {
    %c0 = arith.constant 0 : index
    %c0_0 = arith.constant 0 : index
    %c0_1 = arith.constant 0 : index
    %0 = vector.load %arg1[%c0, %c0_0, %c0_1] : memref<2x64x32xbf16, #tpu.memory_space<vmem>>, vector<2x64x32xbf16>
    %1 = vector.shape_cast %0 : vector<2x64x32xbf16> to vector<128x32xbf16>
    %c0_2 = arith.constant 0 : index
    %c0_3 = arith.constant 0 : index
    %2 = vector.load %arg2[%c0_2, %c0_3] : memref<32x96xbf16, #tpu.memory_space<vmem>>, vector<32x96xbf16>
    %cst = arith.constant dense<0.000000e+00> : vector<128x96xf32>
    %3 = tpu.matmul %1, %2, %cst {dimension_numbers = #tpu.dot_dimension_numbers<[1], [0], [0], [1], [0, 0, 1, 1], [], []>} : vector<128x32xbf16>, vector<32x96xbf16>, vector<128x96xf32> -> vector<128x96xf32>
    %c0_4 = arith.constant 0 : index
    %c0_5 = arith.constant 0 : index
    %4 = vector.load %arg3[%c0_4, %c0_5] : memref<1x96xf32, #tpu.memory_space<vmem>>, vector<1x96xf32>
    %5 = vector.broadcast %4 : vector<1x96xf32> to vector<128x96xf32>
    %6 = arith.addf %3, %5 : vector<128x96xf32>
    %7 = arith.truncf %6 : vector<128x96xf32> to vector<128x96xbf16>
    %cst_6 = arith.constant 0.000000e+00 : f32
    %8 = vector.broadcast %cst_6 : f32 to vector<128x32xf32>
    %9 = vector.extract_strided_slice %7 {offsets = [0, 0], sizes = [128, 8], strides = [1, 1]} : vector<128x96xbf16> to vector<128x8xbf16>
    %10 = vector.shape_cast %9 : vector<128x8xbf16> to vector<2x64x8xbf16>
    %11 = vector.extract_strided_slice %7 {offsets = [0, 32], sizes = [128, 8], strides = [1, 1]} : vector<128x96xbf16> to vector<128x8xbf16>
    %12 = vector.shape_cast %11 : vector<128x8xbf16> to vector<2x64x8xbf16>
    %13 = vector.extract_strided_slice %7 {offsets = [0, 64], sizes = [128, 8], strides = [1, 1]} : vector<128x96xbf16> to vector<128x8xbf16>
    %14 = vector.shape_cast %13 : vector<128x8xbf16> to vector<2x64x8xbf16>
    "tpu.trace_start"() <{level = 10 : i32, message = "bnd,bmd->bnm"}> : () -> ()
    %cst_7 = arith.constant dense<0.000000e+00> : vector<2x64x64xf32>
    %15 = tpu.matmul %10, %12, %cst_7 {dimension_numbers = #tpu.dot_dimension_numbers<[2], [2], [1], [1], [0, 0, 0, 1, 1, 1], [0], [0]>} : vector<2x64x8xbf16>, vector<2x64x8xbf16>, vector<2x64x64xf32> -> vector<2x64x64xf32>
    "tpu.trace_stop"() : () -> ()
    %c0_8 = arith.constant 0 : index
    %c0_9 = arith.constant 0 : index
    %c0_10 = arith.constant 0 : index
    %c0_11 = arith.constant 0 : index
    %16 = vector.load %arg6[%c0_8, %c0_9, %c0_10, %c0_11] : memref<4x2x64x64xbf16, #tpu.memory_space<vmem>>, vector<1x2x64x64xbf16>
    %17 = vector.shape_cast %16 : vector<1x2x64x64xbf16> to vector<2x64x64xbf16>
    %18 = arith.extf %17 : vector<2x64x64xbf16> to vector<2x64x64xf32>
    %19 = arith.addf %15, %18 : vector<2x64x64xf32>
    %cst_12 = arith.constant dense<0xFF800000> : vector<2x64xf32>
    %20 = vector.multi_reduction <maximumf>, %19, %cst_12 [2] : vector<2x64x64xf32> to vector<2x64xf32>
    %21 = vector.shape_cast %20 : vector<2x64xf32> to vector<2x64x1xf32>
    %22 = vector.broadcast %21 : vector<2x64x1xf32> to vector<2x64x64xf32>
    %23 = arith.subf %19, %22 : vector<2x64x64xf32>
    %24 = math.exp %23 : vector<2x64x64xf32>
    %cst_13 = arith.constant dense<0.000000e+00> : vector<2x64xf32>
    %25 = vector.multi_reduction <add>, %24, %cst_13 [2] : vector<2x64x64xf32> to vector<2x64xf32>
    %26 = vector.shape_cast %25 : vector<2x64xf32> to vector<2x64x1xf32>
    %27 = tpu.reciprocal %26 {approx = true} : vector<2x64x1xf32> -> vector<2x64x1xf32>
    %28 = vector.broadcast %27 : vector<2x64x1xf32> to vector<2x64x64xf32>
    %29 = arith.mulf %24, %28 : vector<2x64x64xf32>
    %cst_14 = arith.constant 9.99999993E-9 : f32
    %30 = vector.broadcast %cst_14 : f32 to vector<2x64x64xf32>
    %31 = arith.maximumf %29, %30 : vector<2x64x64xf32>
    %32 = arith.truncf %31 : vector<2x64x64xf32> to vector<2x64x64xbf16>
    "tpu.trace_start"() <{level = 10 : i32, message = "bnm,bmd->bnd"}> : () -> ()
    %cst_15 = arith.constant dense<0.000000e+00> : vector<2x64x8xf32>
    %33 = tpu.matmul %32, %14, %cst_15 {dimension_numbers = #tpu.dot_dimension_numbers<[2], [1], [1], [2], [0, 0, 0, 1, 1, 2], [0], [0]>} : vector<2x64x64xbf16>, vector<2x64x8xbf16>, vector<2x64x8xf32> -> vector<2x64x8xf32>
    "tpu.trace_stop"() : () -> ()
    %34 = vector.shape_cast %33 : vector<2x64x8xf32> to vector<128x8xf32>
    %35 = arith.truncf %34 : vector<128x8xf32> to vector<128x8xbf16>
    %c0_16 = arith.constant 0 : index
    %c0_17 = arith.constant 0 : index
    %c0_18 = arith.constant 0 : index
    %36 = vector.load %arg4[%c0_16, %c0_17, %c0_18] : memref<4x8x32xbf16, #tpu.memory_space<vmem>>, vector<1x8x32xbf16>
    %37 = vector.shape_cast %36 : vector<1x8x32xbf16> to vector<8x32xbf16>
    %cst_19 = arith.constant dense<0.000000e+00> : vector<128x32xf32>
    %38 = tpu.matmul %35, %37, %cst_19 {dimension_numbers = #tpu.dot_dimension_numbers<[1], [0], [0], [1], [0, 0, 1, 1], [], []>} : vector<128x8xbf16>, vector<8x32xbf16>, vector<128x32xf32> -> vector<128x32xf32>
    %39 = arith.addf %8, %38 : vector<128x32xf32>
    %40 = vector.extract_strided_slice %7 {offsets = [0, 8], sizes = [128, 8], strides = [1, 1]} : vector<128x96xbf16> to vector<128x8xbf16>
    %41 = vector.shape_cast %40 : vector<128x8xbf16> to vector<2x64x8xbf16>
    %42 = vector.extract_strided_slice %7 {offsets = [0, 40], sizes = [128, 8], strides = [1, 1]} : vector<128x96xbf16> to vector<128x8xbf16>
    %43 = vector.shape_cast %42 : vector<128x8xbf16> to vector<2x64x8xbf16>
    %44 = vector.extract_strided_slice %7 {offsets = [0, 72], sizes = [128, 8], strides = [1, 1]} : vector<128x96xbf16> to vector<128x8xbf16>
    %45 = vector.shape_cast %44 : vector<128x8xbf16> to vector<2x64x8xbf16>
    "tpu.trace_start"() <{level = 10 : i32, message = "bnd,bmd->bnm"}> : () -> ()
    %cst_20 = arith.constant dense<0.000000e+00> : vector<2x64x64xf32>
    %46 = tpu.matmul %41, %43, %cst_20 {dimension_numbers = #tpu.dot_dimension_numbers<[2], [2], [1], [1], [0, 0, 0, 1, 1, 1], [0], [0]>} : vector<2x64x8xbf16>, vector<2x64x8xbf16>, vector<2x64x64xf32> -> vector<2x64x64xf32>
    "tpu.trace_stop"() : () -> ()
    %c1 = arith.constant 1 : index
    %c0_21 = arith.constant 0 : index
    %c0_22 = arith.constant 0 : index
    %c0_23 = arith.constant 0 : index
    %47 = vector.load %arg6[%c1, %c0_21, %c0_22, %c0_23] : memref<4x2x64x64xbf16, #tpu.memory_space<vmem>>, vector<1x2x64x64xbf16>
    %48 = vector.shape_cast %47 : vector<1x2x64x64xbf16> to vector<2x64x64xbf16>
    %49 = arith.extf %48 : vector<2x64x64xbf16> to vector<2x64x64xf32>
    %50 = arith.addf %46, %49 : vector<2x64x64xf32>
    %cst_24 = arith.constant dense<0xFF800000> : vector<2x64xf32>
    %51 = vector.multi_reduction <maximumf>, %50, %cst_24 [2] : vector<2x64x64xf32> to vector<2x64xf32>
    %52 = vector.shape_cast %51 : vector<2x64xf32> to vector<2x64x1xf32>
    %53 = vector.broadcast %52 : vector<2x64x1xf32> to vector<2x64x64xf32>
    %54 = arith.subf %50, %53 : vector<2x64x64xf32>
    %55 = math.exp %54 : vector<2x64x64xf32>
    %cst_25 = arith.constant dense<0.000000e+00> : vector<2x64xf32>
    %56 = vector.multi_reduction <add>, %55, %cst_25 [2] : vector<2x64x64xf32> to vector<2x64xf32>
    %57 = vector.shape_cast %56 : vector<2x64xf32> to vector<2x64x1xf32>
    %58 = tpu.reciprocal %57 {approx = true} : vector<2x64x1xf32> -> vector<2x64x1xf32>
    %59 = vector.broadcast %58 : vector<2x64x1xf32> to vector<2x64x64xf32>
    %60 = arith.mulf %55, %59 : vector<2x64x64xf32>
    %cst_26 = arith.constant 9.99999993E-9 : f32
    %61 = vector.broadcast %cst_26 : f32 to vector<2x64x64xf32>
    %62 = arith.maximumf %60, %61 : vector<2x64x64xf32>
    %63 = arith.truncf %62 : vector<2x64x64xf32> to vector<2x64x64xbf16>
    "tpu.trace_start"() <{level = 10 : i32, message = "bnm,bmd->bnd"}> : () -> ()
    %cst_27 = arith.constant dense<0.000000e+00> : vector<2x64x8xf32>
    %64 = tpu.matmul %63, %45, %cst_27 {dimension_numbers = #tpu.dot_dimension_numbers<[2], [1], [1], [2], [0, 0, 0, 1, 1, 2], [0], [0]>} : vector<2x64x64xbf16>, vector<2x64x8xbf16>, vector<2x64x8xf32> -> vector<2x64x8xf32>
    "tpu.trace_stop"() : () -> ()
    %65 = vector.shape_cast %64 : vector<2x64x8xf32> to vector<128x8xf32>
    %66 = arith.truncf %65 : vector<128x8xf32> to vector<128x8xbf16>
    %c1_28 = arith.constant 1 : index
    %c0_29 = arith.constant 0 : index
    %c0_30 = arith.constant 0 : index
    %67 = vector.load %arg4[%c1_28, %c0_29, %c0_30] : memref<4x8x32xbf16, #tpu.memory_space<vmem>>, vector<1x8x32xbf16>
    %68 = vector.shape_cast %67 : vector<1x8x32xbf16> to vector<8x32xbf16>
    %cst_31 = arith.constant dense<0.000000e+00> : vector<128x32xf32>
    %69 = tpu.matmul %66, %68, %cst_31 {dimension_numbers = #tpu.dot_dimension_numbers<[1], [0], [0], [1], [0, 0, 1, 1], [], []>} : vector<128x8xbf16>, vector<8x32xbf16>, vector<128x32xf32> -> vector<128x32xf32>
    %70 = arith.addf %39, %69 : vector<128x32xf32>
    %71 = vector.extract_strided_slice %7 {offsets = [0, 16], sizes = [128, 8], strides = [1, 1]} : vector<128x96xbf16> to vector<128x8xbf16>
    %72 = vector.shape_cast %71 : vector<128x8xbf16> to vector<2x64x8xbf16>
    %73 = vector.extract_strided_slice %7 {offsets = [0, 48], sizes = [128, 8], strides = [1, 1]} : vector<128x96xbf16> to vector<128x8xbf16>
    %74 = vector.shape_cast %73 : vector<128x8xbf16> to vector<2x64x8xbf16>
    %75 = vector.extract_strided_slice %7 {offsets = [0, 80], sizes = [128, 8], strides = [1, 1]} : vector<128x96xbf16> to vector<128x8xbf16>
    %76 = vector.shape_cast %75 : vector<128x8xbf16> to vector<2x64x8xbf16>
    "tpu.trace_start"() <{level = 10 : i32, message = "bnd,bmd->bnm"}> : () -> ()
    %cst_32 = arith.constant dense<0.000000e+00> : vector<2x64x64xf32>
    %77 = tpu.matmul %72, %74, %cst_32 {dimension_numbers = #tpu.dot_dimension_numbers<[2], [2], [1], [1], [0, 0, 0, 1, 1, 1], [0], [0]>} : vector<2x64x8xbf16>, vector<2x64x8xbf16>, vector<2x64x64xf32> -> vector<2x64x64xf32>
    "tpu.trace_stop"() : () -> ()
    %c2 = arith.constant 2 : index
    %c0_33 = arith.constant 0 : index
    %c0_34 = arith.constant 0 : index
    %c0_35 = arith.constant 0 : index
    %78 = vector.load %arg6[%c2, %c0_33, %c0_34, %c0_35] : memref<4x2x64x64xbf16, #tpu.memory_space<vmem>>, vector<1x2x64x64xbf16>
    %79 = vector.shape_cast %78 : vector<1x2x64x64xbf16> to vector<2x64x64xbf16>
    %80 = arith.extf %79 : vector<2x64x64xbf16> to vector<2x64x64xf32>
    %81 = arith.addf %77, %80 : vector<2x64x64xf32>
    %cst_36 = arith.constant dense<0xFF800000> : vector<2x64xf32>
    %82 = vector.multi_reduction <maximumf>, %81, %cst_36 [2] : vector<2x64x64xf32> to vector<2x64xf32>
    %83 = vector.shape_cast %82 : vector<2x64xf32> to vector<2x64x1xf32>
    %84 = vector.broadcast %83 : vector<2x64x1xf32> to vector<2x64x64xf32>
    %85 = arith.subf %81, %84 : vector<2x64x64xf32>
    %86 = math.exp %85 : vector<2x64x64xf32>
    %cst_37 = arith.constant dense<0.000000e+00> : vector<2x64xf32>
    %87 = vector.multi_reduction <add>, %86, %cst_37 [2] : vector<2x64x64xf32> to vector<2x64xf32>
    %88 = vector.shape_cast %87 : vector<2x64xf32> to vector<2x64x1xf32>
    %89 = tpu.reciprocal %88 {approx = true} : vector<2x64x1xf32> -> vector<2x64x1xf32>
    %90 = vector.broadcast %89 : vector<2x64x1xf32> to vector<2x64x64xf32>
    %91 = arith.mulf %86, %90 : vector<2x64x64xf32>
    %cst_38 = arith.constant 9.99999993E-9 : f32
    %92 = vector.broadcast %cst_38 : f32 to vector<2x64x64xf32>
    %93 = arith.maximumf %91, %92 : vector<2x64x64xf32>
    %94 = arith.truncf %93 : vector<2x64x64xf32> to vector<2x64x64xbf16>
    "tpu.trace_start"() <{level = 10 : i32, message = "bnm,bmd->bnd"}> : () -> ()
    %cst_39 = arith.constant dense<0.000000e+00> : vector<2x64x8xf32>
    %95 = tpu.matmul %94, %76, %cst_39 {dimension_numbers = #tpu.dot_dimension_numbers<[2], [1], [1], [2], [0, 0, 0, 1, 1, 2], [0], [0]>} : vector<2x64x64xbf16>, vector<2x64x8xbf16>, vector<2x64x8xf32> -> vector<2x64x8xf32>
    "tpu.trace_stop"() : () -> ()
    %96 = vector.shape_cast %95 : vector<2x64x8xf32> to vector<128x8xf32>
    %97 = arith.truncf %96 : vector<128x8xf32> to vector<128x8xbf16>
    %c2_40 = arith.constant 2 : index
    %c0_41 = arith.constant 0 : index
    %c0_42 = arith.constant 0 : index
    %98 = vector.load %arg4[%c2_40, %c0_41, %c0_42] : memref<4x8x32xbf16, #tpu.memory_space<vmem>>, vector<1x8x32xbf16>
    %99 = vector.shape_cast %98 : vector<1x8x32xbf16> to vector<8x32xbf16>
    %cst_43 = arith.constant dense<0.000000e+00> : vector<128x32xf32>
    %100 = tpu.matmul %97, %99, %cst_43 {dimension_numbers = #tpu.dot_dimension_numbers<[1], [0], [0], [1], [0, 0, 1, 1], [], []>} : vector<128x8xbf16>, vector<8x32xbf16>, vector<128x32xf32> -> vector<128x32xf32>
    %101 = arith.addf %70, %100 : vector<128x32xf32>
    %102 = vector.extract_strided_slice %7 {offsets = [0, 24], sizes = [128, 8], strides = [1, 1]} : vector<128x96xbf16> to vector<128x8xbf16>
    %103 = vector.shape_cast %102 : vector<128x8xbf16> to vector<2x64x8xbf16>
    %104 = vector.extract_strided_slice %7 {offsets = [0, 56], sizes = [128, 8], strides = [1, 1]} : vector<128x96xbf16> to vector<128x8xbf16>
    %105 = vector.shape_cast %104 : vector<128x8xbf16> to vector<2x64x8xbf16>
    %106 = vector.extract_strided_slice %7 {offsets = [0, 88], sizes = [128, 8], strides = [1, 1]} : vector<128x96xbf16> to vector<128x8xbf16>
    %107 = vector.shape_cast %106 : vector<128x8xbf16> to vector<2x64x8xbf16>
    "tpu.trace_start"() <{level = 10 : i32, message = "bnd,bmd->bnm"}> : () -> ()
    %cst_44 = arith.constant dense<0.000000e+00> : vector<2x64x64xf32>
    %108 = tpu.matmul %103, %105, %cst_44 {dimension_numbers = #tpu.dot_dimension_numbers<[2], [2], [1], [1], [0, 0, 0, 1, 1, 1], [0], [0]>} : vector<2x64x8xbf16>, vector<2x64x8xbf16>, vector<2x64x64xf32> -> vector<2x64x64xf32>
    "tpu.trace_stop"() : () -> ()
    %c3 = arith.constant 3 : index
    %c0_45 = arith.constant 0 : index
    %c0_46 = arith.constant 0 : index
    %c0_47 = arith.constant 0 : index
    %109 = vector.load %arg6[%c3, %c0_45, %c0_46, %c0_47] : memref<4x2x64x64xbf16, #tpu.memory_space<vmem>>, vector<1x2x64x64xbf16>
    %110 = vector.shape_cast %109 : vector<1x2x64x64xbf16> to vector<2x64x64xbf16>
    %111 = arith.extf %110 : vector<2x64x64xbf16> to vector<2x64x64xf32>
    %112 = arith.addf %108, %111 : vector<2x64x64xf32>
    %cst_48 = arith.constant dense<0xFF800000> : vector<2x64xf32>
    %113 = vector.multi_reduction <maximumf>, %112, %cst_48 [2] : vector<2x64x64xf32> to vector<2x64xf32>
    %114 = vector.shape_cast %113 : vector<2x64xf32> to vector<2x64x1xf32>
    %115 = vector.broadcast %114 : vector<2x64x1xf32> to vector<2x64x64xf32>
    %116 = arith.subf %112, %115 : vector<2x64x64xf32>
    %117 = math.exp %116 : vector<2x64x64xf32>
    %cst_49 = arith.constant dense<0.000000e+00> : vector<2x64xf32>
    %118 = vector.multi_reduction <add>, %117, %cst_49 [2] : vector<2x64x64xf32> to vector<2x64xf32>
    %119 = vector.shape_cast %118 : vector<2x64xf32> to vector<2x64x1xf32>
    %120 = tpu.reciprocal %119 {approx = true} : vector<2x64x1xf32> -> vector<2x64x1xf32>
    %121 = vector.broadcast %120 : vector<2x64x1xf32> to vector<2x64x64xf32>
    %122 = arith.mulf %117, %121 : vector<2x64x64xf32>
    %cst_50 = arith.constant 9.99999993E-9 : f32
    %123 = vector.broadcast %cst_50 : f32 to vector<2x64x64xf32>
    %124 = arith.maximumf %122, %123 : vector<2x64x64xf32>
    %125 = arith.truncf %124 : vector<2x64x64xf32> to vector<2x64x64xbf16>
    "tpu.trace_start"() <{level = 10 : i32, message = "bnm,bmd->bnd"}> : () -> ()
    %cst_51 = arith.constant dense<0.000000e+00> : vector<2x64x8xf32>
    %126 = tpu.matmul %125, %107, %cst_51 {dimension_numbers = #tpu.dot_dimension_numbers<[2], [1], [1], [2], [0, 0, 0, 1, 1, 2], [0], [0]>} : vector<2x64x64xbf16>, vector<2x64x8xbf16>, vector<2x64x8xf32> -> vector<2x64x8xf32>
    "tpu.trace_stop"() : () -> ()
    %127 = vector.shape_cast %126 : vector<2x64x8xf32> to vector<128x8xf32>
    %128 = arith.truncf %127 : vector<128x8xf32> to vector<128x8xbf16>
    %c3_52 = arith.constant 3 : index
    %c0_53 = arith.constant 0 : index
    %c0_54 = arith.constant 0 : index
    %129 = vector.load %arg4[%c3_52, %c0_53, %c0_54] : memref<4x8x32xbf16, #tpu.memory_space<vmem>>, vector<1x8x32xbf16>
    %130 = vector.shape_cast %129 : vector<1x8x32xbf16> to vector<8x32xbf16>
    %cst_55 = arith.constant dense<0.000000e+00> : vector<128x32xf32>
    %131 = tpu.matmul %128, %130, %cst_55 {dimension_numbers = #tpu.dot_dimension_numbers<[1], [0], [0], [1], [0, 0, 1, 1], [], []>} : vector<128x8xbf16>, vector<8x32xbf16>, vector<128x32xf32> -> vector<128x32xf32>
    %132 = arith.addf %101, %131 : vector<128x32xf32>
    %c0_56 = arith.constant 0 : index
    %c0_57 = arith.constant 0 : index
    %133 = vector.load %arg5[%c0_56, %c0_57] : memref<1x32xf32, #tpu.memory_space<vmem>>, vector<1x32xf32>
    %134 = vector.broadcast %133 : vector<1x32xf32> to vector<128x32xf32>
    %135 = arith.addf %132, %134 : vector<128x32xf32>
    %136 = vector.shape_cast %135 : vector<128x32xf32> to vector<2x64x32xf32>
    %c0_58 = arith.constant 0 : index
    %c0_59 = arith.constant 0 : index
    %c0_60 = arith.constant 0 : index
    %137 = vector.load %arg7[%c0_58, %c0_59, %c0_60] : memref<2x64x32xf32, #tpu.memory_space<vmem>>, vector<2x64x32xf32>
    tpu.vector_store %arg7[%c0_58, %c0_59, %c0_60], %136 {strides = array<i32>} : memref<2x64x32xf32, #tpu.memory_space<vmem>>, vector<2x64x32xf32>,
    return
  }
  func.func @transform_0(%arg0: i32) -> (i32, i32, i32) {
    %c0_i32 = arith.constant 0 : i32
    %c0_i32_0 = arith.constant 0 : i32
    %c0_i32_1 = arith.constant 0 : i32
    return %arg0, %c0_i32, %c0_i32_0 : i32, i32, i32
  }
  func.func @transform_1(%arg0: i32) -> (i32, i32) {
    %c0_i32 = arith.constant 0 : i32
    %c0_i32_0 = arith.constant 0 : i32
    %c0_i32_1 = arith.constant 0 : i32
    return %c0_i32, %c0_i32_0 : i32, i32
  }
  func.func @transform_2(%arg0: i32) -> (i32, i32) {
    %c0_i32 = arith.constant 0 : i32
    %c0_i32_0 = arith.constant 0 : i32
    %c0_i32_1 = arith.constant 0 : i32
    return %c0_i32, %c0_i32_0 : i32, i32
  }
  func.func @transform_3(%arg0: i32) -> (i32, i32, i32) {
    %c0_i32 = arith.constant 0 : i32
    %c0_i32_0 = arith.constant 0 : i32
    %c0_i32_1 = arith.constant 0 : i32
    %c0_i32_2 = arith.constant 0 : i32
    return %c0_i32, %c0_i32_0, %c0_i32_1 : i32, i32, i32
  }
  func.func @transform_4(%arg0: i32) -> (i32, i32) {
    %c0_i32 = arith.constant 0 : i32
    %c0_i32_0 = arith.constant 0 : i32
    %c0_i32_1 = arith.constant 0 : i32
    return %c0_i32, %c0_i32_0 : i32, i32
  }
  func.func @transform_5(%arg0: i32) -> (i32, i32, i32, i32) {
    %c0_i32 = arith.constant 0 : i32
    %c0_i32_0 = arith.constant 0 : i32
    %c0_i32_1 = arith.constant 0 : i32
    %c0_i32_2 = arith.constant 0 : i32
    %c0_i32_3 = arith.constant 0 : i32
    return %c0_i32, %c0_i32_0, %c0_i32_1, %c0_i32_2 : i32, i32, i32, i32
  }
  func.func @transform_6(%arg0: i32) -> (i32, i32, i32) {
    %c0_i32 = arith.constant 0 : i32
    %c0_i32_0 = arith.constant 0 : i32
    %c0_i32_1 = arith.constant 0 : i32
    return %arg0, %c0_i32, %c0_i32_0 : i32, i32, i32
  }
}

</mosaic_0001>

<llo_original>
// kernel: tpu_custom_call.1
$region0: #{tpu_custom_call.1}
  #allocation0 [shape = 'u32[]', space=smem, size = 0x4, offset = 0x4, fixed_abs, tag = 'smem constant byte address 0x4 - core index']
  #allocation1 [shape = 'u32[72,128]{1,0:T(1,128)}', space=vmem, size = 0x9000, scoped, tag = 'internal scratch']
  %s0 = inlined_call_operand.vmem [shape: bf16[4,64,32], index: 0, kind: input, shape index: {}]
  %s1 = inlined_call_operand.vmem [shape: bf16[32,96], index: 1, kind: input, shape index: {}]
  %s2 = inlined_call_operand.vmem [shape: f32[1,96], index: 2, kind: input, shape index: {}]
  %s3 = inlined_call_operand.vmem [shape: bf16[4,8,32], index: 3, kind: input, shape index: {}]
  %s4 = inlined_call_operand.vmem [shape: f32[1,32], index: 4, kind: input, shape index: {}]
  %s5 = inlined_call_operand.hbm [shape: bf16[4,2,64,64], index: 5, kind: input, shape index: {}]
  %s6 = inlined_call_operand.vmem [shape: f32[4,64,32], index: 6, kind: output, shape index: {}]
  %s7 = sld [smem:[#allocation0]]
  $region61: #{tpu_custom_call.1} parent=0
    _
  %s9 = ssub.s32 1, %s7
  %s10 = scalar_select 0, %s9, %s7
  $region1: #{tpu_custom_call.1} parent=0
    #allocation2 [shape = 'u8[131072]{0}', space=vmem, size = 0x20000, scoped, tag = 'input window, operand 5, single buffered']
    #allocation3 [shape = 's32[2]{0}', space=sflag, size = 0x8, scoped, tag = 'scoped memory for tpu_custom_call.1']
    %11 = vsyncpa [#allocation3], 0
    loop: start=0, step=1, limit=4
    $region2: #{tpu_custom_call.1} parent=1 // loop_pre_header
      _
    $region3: #{tpu_custom_call.1} parent=1 // loop_header
      %s13 = sphi 0, %s17
      %p14 = scmp.ge.s32.totalorder %s13, 4
      %s23 = sphi 0, %s25
      %s26 = sphi 0, %s23
      %s27 = sphi 0, %s26
      %s43 = sphi 0, %s27
      %s47 = sphi 0, %s47
      %s49 = sphi 0, %s47
      %s50 = sphi 0, %s49
      %s64 = sphi 0, %s50
      %s68 = sphi 0, %s68
      %s70 = sphi 0, %s68
      %s71 = sphi 0, %s70
      %s85 = sphi 0, %s71
      %s89 = sphi 0, %s89
      %s91 = sphi 0, %s89
      %s92 = sphi 0, %s91
      %s106 = sphi 0, %s92
      %s110 = sphi 0, %s110
      %s112 = sphi 0, %s110
      %s113 = sphi 0, %s112
      %s127 = sphi 0, %s113
      %s131 = sphi 0, %s131
      %s133 = sphi 0, %s131
      %s134 = sphi 0, %s133
      %s148 = sphi 0, %s134
      %s154 = sphi 0, %s156
      %s157 = sphi 0, %s154
      %s158 = sphi 0, %s157
      %s174 = sphi 0, %s158
    $region4: #{tpu_custom_call.1} parent=1 // loop_header_branch
      %16 = sbr.rel (%p14) target = $region8
    $region5: #{tpu_custom_call.1} parent=1 // loop_body
      %s18 = ssub.s32 %s13, 1
      %s19 = ssub.s32 %s13, 2
      %s20 = sadd.s32 %s13, 1
      %s21 = ssub.s32 %s13, %s20
      %p22 = scmp.eq.s32.totalorder %s21, 0
      %s24 = sadd.s32 %s23, 1
      %s25 = scalar_select %p22, %s23, %s24
      %p28 = pneg %p22
      %p29 = scmp.eq.s32.totalorder %s13, 1
      %p30 = por %p28, %p29
      %p31 = scmp.ne.s32.totalorder %s23, %s26
      %p32 = scmp.eq.s32.totalorder %s13, 0
      %p33 = por %p31, %p32
      %p34 = scmp.ne.s32.totalorder %s23, %s26
      %p35 = scmp.eq.s32.totalorder %s18, 1
      %p36 = por %p34, %p35
      %p37 = scmp.ne.s32.totalorder %s26, %s27
      %p38 = scmp.eq.s32.totalorder %s18, 0
      %p39 = por %p37, %p38
      %p40 = scmp.ne.s32.totalorder %s26, %s27
      %p41 = scmp.eq.s32.totalorder %s19, 1
      %p42 = por %p40, %p41
      %p44 = scmp.ne.s32.totalorder %s27, %s43
      %p45 = scmp.eq.s32.totalorder %s19, 0
      %p46 = por %p44, %p45
      %s48 = sadd.s32 %s47, 1
      %p51 = scmp.eq.s32.totalorder %s13, 1
      %p52 = scmp.ne.s32.totalorder %s47, %s49
      %p53 = scmp.eq.s32.totalorder %s13, 0
      %p54 = por %p52, %p53
      %p55 = scmp.ne.s32.totalorder %s47, %s49
      %p56 = scmp.eq.s32.totalorder %s18, 1
      %p57 = por %p55, %p56
      %p58 = scmp.ne.s32.totalorder %s49, %s50
      %p59 = scmp.eq.s32.totalorder %s18, 0
      %p60 = por %p58, %p59
      %p61 = scmp.ne.s32.totalorder %s49, %s50
      %p62 = scmp.eq.s32.totalorder %s19, 1
      %p63 = por %p61, %p62
      %p65 = scmp.ne.s32.totalorder %s50, %s64
      %p66 = scmp.eq.s32.totalorder %s19, 0
      %p67 = por %p65, %p66
      %s69 = sadd.s32 %s68, 1
      %p72 = scmp.eq.s32.totalorder %s13, 1
      %p73 = scmp.ne.s32.totalorder %s68, %s70
      %p74 = scmp.eq.s32.totalorder %s13, 0
      %p75 = por %p73, %p74
      %p76 = scmp.ne.s32.totalorder %s68, %s70
      %p77 = scmp.eq.s32.totalorder %s18, 1
      %p78 = por %p76, %p77
      %p79 = scmp.ne.s32.totalorder %s70, %s71
      %p80 = scmp.eq.s32.totalorder %s18, 0
      %p81 = por %p79, %p80
      %p82 = scmp.ne.s32.totalorder %s70, %s71
      %p83 = scmp.eq.s32.totalorder %s19, 1
      %p84 = por %p82, %p83
      %p86 = scmp.ne.s32.totalorder %s71, %s85
      %p87 = scmp.eq.s32.totalorder %s19, 0
      %p88 = por %p86, %p87
      %s90 = sadd.s32 %s89, 1
      %p93 = scmp.eq.s32.totalorder %s13, 1
      %p94 = scmp.ne.s32.totalorder %s89, %s91
      %p95 = scmp.eq.s32.totalorder %s13, 0
      %p96 = por %p94, %p95
      %p97 = scmp.ne.s32.totalorder %s89, %s91
      %p98 = scmp.eq.s32.totalorder %s18, 1
      %p99 = por %p97, %p98
      %p100 = scmp.ne.s32.totalorder %s91, %s92
      %p101 = scmp.eq.s32.totalorder %s18, 0
      %p102 = por %p100, %p101
      %p103 = scmp.ne.s32.totalorder %s91, %s92
      %p104 = scmp.eq.s32.totalorder %s19, 1
      %p105 = por %p103, %p104
      %p107 = scmp.ne.s32.totalorder %s92, %s106
      %p108 = scmp.eq.s32.totalorder %s19, 0
      %p109 = por %p107, %p108
      %s111 = sadd.s32 %s110, 1
      %p114 = scmp.eq.s32.totalorder %s13, 1
      %p115 = scmp.ne.s32.totalorder %s110, %s112
      %p116 = scmp.eq.s32.totalorder %s13, 0
      %p117 = por %p115, %p116
      %p118 = scmp.ne.s32.totalorder %s110, %s112
      %p119 = scmp.eq.s32.totalorder %s18, 1
      %p120 = por %p118, %p119
      %p121 = scmp.ne.s32.totalorder %s112, %s113
      %p122 = scmp.eq.s32.totalorder %s18, 0
      %p123 = por %p121, %p122
      %p124 = scmp.ne.s32.totalorder %s112, %s113
      %p125 = scmp.eq.s32.totalorder %s19, 1
      %p126 = por %p124, %p125
      %p128 = scmp.ne.s32.totalorder %s113, %s127
      %p129 = scmp.eq.s32.totalorder %s19, 0
      %p130 = por %p128, %p129
      %s132 = sadd.s32 %s131, 1
      %p135 = scmp.eq.s32.totalorder %s13, 1
      %p136 = scmp.ne.s32.totalorder %s131, %s133
      %p137 = scmp.eq.s32.totalorder %s13, 0
      %p138 = por %p136, %p137
      %p139 = scmp.ne.s32.totalorder %s131, %s133
      %p140 = scmp.eq.s32.totalorder %s18, 1
      %p141 = por %p139, %p140
      %p142 = scmp.ne.s32.totalorder %s133, %s134
      %p143 = scmp.eq.s32.totalorder %s18, 0
      %p144 = por %p142, %p143
      %p145 = scmp.ne.s32.totalorder %s133, %s134
      %p146 = scmp.eq.s32.totalorder %s19, 1
      %p147 = por %p145, %p146
      %p149 = scmp.ne.s32.totalorder %s134, %s148
      %p150 = scmp.eq.s32.totalorder %s19, 0
      %p151 = por %p149, %p150
      %s152 = ssub.s32 %s13, %s20
      %p153 = scmp.eq.s32.totalorder %s152, 0
      %s155 = sadd.s32 %s154, 1
      %s156 = scalar_select %p153, %s154, %s155
      %p159 = pneg %p153
      %p160 = scmp.eq.s32.totalorder %s13, 1
      %p161 = por %p159, %p160
      %p162 = scmp.ne.s32.totalorder %s154, %s157
      %p163 = scmp.eq.s32.totalorder %s13, 0
      %p164 = por %p162, %p163
      %p165 = scmp.ne.s32.totalorder %s154, %s157
      %p166 = scmp.eq.s32.totalorder %s18, 1
      %p167 = por %p165, %p166
      %p168 = scmp.ne.s32.totalorder %s157, %s158
      %p169 = scmp.eq.s32.totalorder %s18, 0
      %p170 = por %p168, %p169
      %p171 = scmp.ne.s32.totalorder %s157, %s158
      %p172 = scmp.eq.s32.totalorder %s19, 1
      %p173 = por %p171, %p172
      %p175 = scmp.ne.s32.totalorder %s158, %s174
      %p176 = scmp.eq.s32.totalorder %s19, 0
      %p177 = por %p175, %p176
      %p178 = scmp.le.s32.totalorder 1, %s13
      %p179 = scmp.lt.s32.totalorder %s13, 3
      %p180 = pnand %p178, %p179
      %p181 = pneg %p180
      // Predicated region
      $region9: #{tpu_custom_call.1} parent=5 // pred_check
        _
      $region10: #{tpu_custom_call.1} parent=5 // pred_check_branch
        %183 = sbr.rel (%p180) target = $region12
      $region11: #{tpu_custom_call.1} parent=5 // pred_region
        %s184 = ssub.s32 %s13, 1
        // Predicated region
        $region13: #{tpu_custom_call.1} parent=11 // pred_check
          %p185 = pneg %p60
        $region14: #{tpu_custom_call.1} parent=11 // pred_check_branch
          %187 = sbr.rel (%p185) target = $region16
        $region15: #{tpu_custom_call.1} parent=11 // pred_region
          _
        $region16: #{tpu_custom_call.1} parent=11 // pred_fallthru
          _
        // Predicated region
        $region17: #{tpu_custom_call.1} parent=11 // pred_check
          %p188 = pneg %p81
        $region18: #{tpu_custom_call.1} parent=11 // pred_check_branch
          %190 = sbr.rel (%p188) target = $region20
        $region19: #{tpu_custom_call.1} parent=11 // pred_region
          _
        $region20: #{tpu_custom_call.1} parent=11 // pred_fallthru
          _
        // Predicated region
        $region21: #{tpu_custom_call.1} parent=11 // pred_check
          %p191 = pneg %p102
        $region22: #{tpu_custom_call.1} parent=11 // pred_check_branch
          %193 = sbr.rel (%p191) target = $region24
        $region23: #{tpu_custom_call.1} parent=11 // pred_region
          _
        $region24: #{tpu_custom_call.1} parent=11 // pred_fallthru
          _
        // Predicated region
        $region25: #{tpu_custom_call.1} parent=11 // pred_check
          %p194 = pneg %p123
        $region26: #{tpu_custom_call.1} parent=11 // pred_check_branch
          %196 = sbr.rel (%p194) target = $region28
        $region27: #{tpu_custom_call.1} parent=11 // pred_region
          _
        $region28: #{tpu_custom_call.1} parent=11 // pred_fallthru
          _
        // Predicated region
        $region29: #{tpu_custom_call.1} parent=11 // pred_check
          %p197 = pneg %p144
        $region30: #{tpu_custom_call.1} parent=11 // pred_check_branch
          %199 = sbr.rel (%p197) target = $region32
        $region31: #{tpu_custom_call.1} parent=11 // pred_region
          %201 = vsyncadd [#allocation3], 0
          %s202 = sshll.u32 %s5, 4
          %s203 = int_to_ptr.hbm [resolvable:$true] %s202
          %s204 = sshll.u32 [#allocation2], 4
          %s205 = int_to_ptr.vmem [resolvable:$true] %s204
          %210 = dma.hbm_to_vmem [thread:$0]  %s203, 4096, %s205, [#allocation3], 64, 64, 4
        $region32: #{tpu_custom_call.1} parent=11 // pred_fallthru
          _
      $region12: #{tpu_custom_call.1} parent=5 // pred_fallthru
        _
      %p211 = scmp.lt.s32.totalorder %s13, 2
      // Predicated region
      $region33: #{tpu_custom_call.1} parent=5 // pred_check
        %p212 = pneg %p211
      $region34: #{tpu_custom_call.1} parent=5 // pred_check_branch
        %214 = sbr.rel (%p212) target = $region36
      $region35: #{tpu_custom_call.1} parent=5 // pred_region
        // Predicated region
        $region37: #{tpu_custom_call.1} parent=35 // pred_check
          %p215 = pneg %p33
        $region38: #{tpu_custom_call.1} parent=35 // pred_check_branch
          %217 = sbr.rel (%p215) target = $region40
        $region39: #{tpu_custom_call.1} parent=35 // pred_region
          %s218 = smul.u32 2, %s13
          %p219 = scmp.lt.s32.totalorder %s218, 3
          %s220 = scalar_select %p219, %s218, 3
          %s221 = smul.addr %s220, 8
          %s222 = smul.addr %s221, 4
          %s223 = scalar_lea.vmem %s0, %s222
          %s224 = smul.u32 2, %s13
        $region40: #{tpu_custom_call.1} parent=35 // pred_fallthru
          _
      $region36: #{tpu_custom_call.1} parent=5 // pred_fallthru
        _
      %p225 = scmp.le.s32.totalorder 1, %s13
      %p226 = scmp.lt.s32.totalorder %s13, 3
      %p227 = pnand %p225, %p226
      %p228 = pneg %p227
      // Predicated region
      $region41: #{tpu_custom_call.1} parent=5 // pred_check
        _
      $region42: #{tpu_custom_call.1} parent=5 // pred_check_branch
        %230 = sbr.rel (%p227) target = $region44
      $region43: #{tpu_custom_call.1} parent=5 // pred_region
        %s231 = ssub.s32 %s13, 1
        // Predicated region
        $region45: #{tpu_custom_call.1} parent=43 // pred_check
          %p232 = pneg %p144
        $region46: #{tpu_custom_call.1} parent=43 // pred_check_branch
          %234 = sbr.rel (%p232) target = $region48
        $region47: #{tpu_custom_call.1} parent=43 // pred_region
          %236 = dma.done [#allocation3], 4096
        $region48: #{tpu_custom_call.1} parent=43 // pred_fallthru
          _
        %s237 = smul.u32 2, %s18
        %p238 = scmp.lt.s32.totalorder %s237, 3
        %s239 = scalar_select %p238, %s237, 3
        %s240 = smul.addr %s239, 8
        %s241 = smul.addr %s240, 4
        %s242 = scalar_lea.vmem %s0, %s241
        %p243 = pneg %p39
        %p244 = pneg %p36
        %p245 = pneg %p60
        %p246 = pneg %p57
        %p247 = pneg %p81
        %p248 = pneg %p78
        %p249 = pneg %p102
        %p250 = pneg %p99
        %p251 = pneg %p123
        %p252 = pneg %p120
        %p253 = pneg %p144
        %p254 = pneg %p141
        %p255 = pneg %p170
        %p256 = pneg %p167
        %s257 = smul.u32 2, %s18
        %p258 = scmp.lt.s32.totalorder %s257, 3
        %s259 = scalar_select %p258, %s257, 3
        %s260 = smul.addr %s259, 8
        %s261 = smul.addr %s260, 8
        %s262 = scalar_lea.vmem %s6, %s261
        %s263 = smul.u32 2, %s18
        %p264 = scmp.lt.s32.totalorder %s263, 3
        %s265 = scalar_select %p264, %s263, 3
        %s266 = smul.addr %s265, 8
        %s267 = smul.addr %s266, 4
        %s268 = scalar_lea.vmem %s0, %s267
        %s269 = smul.u32 2, %s18
        %s270 = smul.u32 2, %s18
        %p271 = scmp.lt.s32.totalorder %s270, 3
        %s272 = scalar_select %p271, %s270, 3
        %s273 = smul.addr %s272, 8
        %s274 = smul.addr %s273, 8
        %s275 = scalar_lea.vmem %s6, %s274
        %s276 = smul.u32 2, %s18
        %v278 = vld [vmem:[%s268] sm:$0xf]
        %v279 = vld [vmem:[%s268 + $0x4] sm:$0xf]
        %v280 = vld [vmem:[%s268 + $0x8] sm:$0xf]
        %v281 = vld [vmem:[%s268 + $0xc] sm:$0xf]
        %v282 = vld [vmem:[%s268 + $0x10] sm:$0xf]
        %v283 = vld [vmem:[%s268 + $0x14] sm:$0xf]
        %v284 = vld [vmem:[%s268 + $0x18] sm:$0xf]
        %v285 = vld [vmem:[%s268 + $0x1c] sm:$0xf]
        %v286 = vld [vmem:[%s268 + $0x20] sm:$0xf]
        %v287 = vld [vmem:[%s268 + $0x24] sm:$0xf]
        %v288 = vld [vmem:[%s268 + $0x28] sm:$0xf]
        %v289 = vld [vmem:[%s268 + $0x2c] sm:$0xf]
        %v290 = vld [vmem:[%s268 + $0x30] sm:$0xf]
        %v291 = vld [vmem:[%s268 + $0x34] sm:$0xf]
        %v292 = vld [vmem:[%s268 + $0x38] sm:$0xf]
        %v293 = vld [vmem:[%s268 + $0x3c] sm:$0xf]
        %v294 = vld [vmem:[%s1] sm:$0xf]
        %v295 = vld [vmem:[%s1 + $0x4] sm:$0xf]
        %v296 = vld [vmem:[%s1 + $0x8] sm:$0xf]
        %v297 = vld [vmem:[%s1 + $0xc] sm:$0xf]
        %v298 = vld [vmem:[%s2] sm:$0x1]
        %v300 = vperm.slane %v298, 0
        %v318 = vunpack.c.l.b16 %v278
        %v319 = vunpack.c.l.b16 %v279
        %v320 = vunpack.c.l.b16 %v280
        %v321 = vunpack.c.l.b16 %v281
        %v322 = vunpack.c.l.b16 %v282
        %v323 = vunpack.c.l.b16 %v283
        %v324 = vunpack.c.l.b16 %v284
        %v325 = vunpack.c.l.b16 %v285
        %v326 = vunpack.c.l.b16 %v286
        %v327 = vunpack.c.l.b16 %v287
        %v328 = vunpack.c.l.b16 %v288
        %v329 = vunpack.c.l.b16 %v289
        %v330 = vunpack.c.l.b16 %v290
        %v331 = vunpack.c.l.b16 %v291
        %v332 = vunpack.c.l.b16 %v292
        %v333 = vunpack.c.l.b16 %v293
        %v334 = vpack.c.b16 %v319, %v318
        %v335 = vpack.c.b16 %v321, %v320
        %v336 = vpack.c.b16 %v323, %v322
        %v337 = vpack.c.b16 %v325, %v324
        %v338 = vpack.c.b16 %v327, %v326
        %v339 = vpack.c.b16 %v329, %v328
        %v340 = vpack.c.b16 %v331, %v330
        %v341 = vpack.c.b16 %v333, %v332
        %v346 = vunpack.c.l.b16 %v294
        %v347 = vunpack.c.l.b16 %v295
        %v348 = vunpack.c.l.b16 %v296
        %v349 = vunpack.c.l.b16 %v297
        %v350 = vpack.c.b16 %v347, %v346
        %v351 = vpack.c.b16 %v349, %v348
        %vm354 = vcmask 261120
        %v356 = vsel %vm354, %v334, 0
        %v359 = vsel %vm354, %v335, 0
        %v362 = vsel %vm354, %v336, 0
        %v365 = vsel %vm354, %v337, 0
        %v368 = vsel %vm354, %v338, 0
        %v371 = vsel %vm354, %v339, 0
        %v374 = vsel %vm354, %v340, 0
        %v377 = vsel %vm354, %v341, 0
        %379 = vmatpush.bf16.msra.mxu0 0
        %380 = vmatpush.bf16.msra.mxu0 0
        %381 = vmatpush.bf16.msra.mxu0 0
        %382 = vmatpush.bf16.msra.mxu0 0
        %383 = vmatpush.bf16.msra.mxu0 0
        %384 = vmatpush.bf16.msra.mxu0 0
        %385 = vmatpush.bf16.msra.mxu0 %v351
        %386 = vmatpush.bf16.msra.mxu0 %v350
        %387 = vmatmul.bf16.gmra.mxu0 %v356
        %v388 = vpop.f32.mrf.mxu0
        %v389 = vadd.f32 %v300, %v388
        %v390 = vpop.f32.mrf.mxu0
        %v391 = vadd.f32 %v300, %v390
        %392 = vmatmul.bf16.gmra.mxu0 %v359
        %v393 = vpop.f32.mrf.mxu0
        %v394 = vadd.f32 %v300, %v393
        %v395 = vpop.f32.mrf.mxu0
        %v396 = vadd.f32 %v300, %v395
        %397 = vmatmul.bf16.gmra.mxu0 %v362
        %v398 = vpop.f32.mrf.mxu0
        %v399 = vadd.f32 %v300, %v398
        %v400 = vpop.f32.mrf.mxu0
        %v401 = vadd.f32 %v300, %v400
        %402 = vmatmul.bf16.gmra.mxu0 %v365
        %v403 = vpop.f32.mrf.mxu0
        %v404 = vadd.f32 %v300, %v403
        %v405 = vpop.f32.mrf.mxu0
        %v406 = vadd.f32 %v300, %v405
        %407 = vmatmul.bf16.gmra.mxu0 %v368
        %v408 = vpop.f32.mrf.mxu0
        %v409 = vadd.f32 %v300, %v408
        %v410 = vpop.f32.mrf.mxu0
        %v411 = vadd.f32 %v300, %v410
        %412 = vmatmul.bf16.gmra.mxu0 %v371
        %v413 = vpop.f32.mrf.mxu0
        %v414 = vadd.f32 %v300, %v413
        %v415 = vpop.f32.mrf.mxu0
        %v416 = vadd.f32 %v300, %v415
        %417 = vmatmul.bf16.gmra.mxu0 %v374
        %v418 = vpop.f32.mrf.mxu0
        %v419 = vadd.f32 %v300, %v418
        %v420 = vpop.f32.mrf.mxu0
        %v421 = vadd.f32 %v300, %v420
        %422 = vmatmul.bf16.gmra.mxu0 %v377
        %v423 = vpop.f32.mrf.mxu0
        %v424 = vadd.f32 %v300, %v423
        %v425 = vpop.f32.mrf.mxu0
        %v426 = vadd.f32 %v300, %v425
        %427 = vdwg.mxu0
        %v428 = vpack.c.bf16 %v389, %v389
        %v429 = vpack.c.bf16 %v391, %v391
        %v430 = vpack.c.bf16 %v394, %v394
        %v431 = vpack.c.bf16 %v396, %v396
        %v432 = vpack.c.bf16 %v399, %v399
        %v433 = vpack.c.bf16 %v401, %v401
        %v434 = vpack.c.bf16 %v404, %v404
        %v435 = vpack.c.bf16 %v406, %v406
        %v436 = vpack.c.bf16 %v409, %v409
        %v437 = vpack.c.bf16 %v411, %v411
        %v438 = vpack.c.bf16 %v414, %v414
        %v439 = vpack.c.bf16 %v416, %v416
        %v440 = vpack.c.bf16 %v419, %v419
        %v441 = vpack.c.bf16 %v421, %v421
        %v442 = vpack.c.bf16 %v424, %v424
        %v443 = vpack.c.bf16 %v426, %v426
        %v444 = vld [vmem:[#allocation2] sm:$0xf]
        %v445 = vld [vmem:[#allocation2 + $0x4] sm:$0xf]
        %v446 = vld [vmem:[#allocation2 + $0x8] sm:$0xf]
        %v447 = vld [vmem:[#allocation2 + $0xc] sm:$0xf]
        %v448 = vld [vmem:[#allocation2 + $0x10] sm:$0xf]
        %v449 = vld [vmem:[#allocation2 + $0x14] sm:$0xf]
        %v450 = vld [vmem:[#allocation2 + $0x18] sm:$0xf]
        %v451 = vld [vmem:[#allocation2 + $0x1c] sm:$0xf]
        %v452 = vld [vmem:[#allocation2 + $0x20] sm:$0xf]
        %v453 = vld [vmem:[#allocation2 + $0x24] sm:$0xf]
        %v454 = vld [vmem:[#allocation2 + $0x28] sm:$0xf]
        %v455 = vld [vmem:[#allocation2 + $0x2c] sm:$0xf]
        %v456 = vld [vmem:[#allocation2 + $0x30] sm:$0xf]
        %v457 = vld [vmem:[#allocation2 + $0x34] sm:$0xf]
        %v458 = vld [vmem:[#allocation2 + $0x38] sm:$0xf]
        %v459 = vld [vmem:[#allocation2 + $0x3c] sm:$0xf]
        %v460 = vunpack.c.l.bf16 %v444
        %v461 = vunpack.c.l.bf16 %v445
        %v462 = vunpack.c.l.bf16 %v446
        %v463 = vunpack.c.l.bf16 %v447
        %v464 = vunpack.c.l.bf16 %v448
        %v465 = vunpack.c.l.bf16 %v449
        %v466 = vunpack.c.l.bf16 %v450
        %v467 = vunpack.c.l.bf16 %v451
        %v468 = vunpack.c.l.bf16 %v452
        %v469 = vunpack.c.l.bf16 %v453
        %v470 = vunpack.c.l.bf16 %v454
        %v471 = vunpack.c.l.bf16 %v455
        %v472 = vunpack.c.l.bf16 %v456
        %v473 = vunpack.c.l.bf16 %v457
        %v474 = vunpack.c.l.bf16 %v458
        %v475 = vunpack.c.l.bf16 %v459
        %v484 = vunpack.c.l.b16 %v428
        %v485 = vunpack.c.l.b16 %v429
        %v486 = vunpack.c.l.b16 %v430
        %v487 = vunpack.c.l.b16 %v431
        %v488 = vunpack.c.l.b16 %v432
        %v489 = vunpack.c.l.b16 %v433
        %v490 = vunpack.c.l.b16 %v434
        %v491 = vunpack.c.l.b16 %v435
        %v492 = vpack.c.b16 %v485, %v484
        %v493 = vpack.c.b16 %v487, %v486
        %v494 = vpack.c.b16 %v489, %v488
        %v495 = vpack.c.b16 %v491, %v490
        %496 = vrot.lane.b32.xlu0 %v492, 96
        %v497 = vpop.permute.xlu0 %496
        %498 = vrot.lane.b32.xlu0 %v493, 96
        %v499 = vpop.permute.xlu0 %498
        %500 = vrot.lane.b32.xlu0 %v494, 96
        %v501 = vpop.permute.xlu0 %500
        %502 = vrot.lane.b32.xlu0 %v495, 96
        %v503 = vpop.permute.xlu0 %502
        %vm504 = vcmask 64512
        %v506 = vsel %vm504, %v492, 0
        %v509 = vsel %vm504, %v493, 0
        %v512 = vsel %vm504, %v494, 0
        %v515 = vsel %vm504, %v495, 0
        %v518 = vsel %vm504, %v497, 0
        %v521 = vsel %vm504, %v499, 0
        %v524 = vsel %vm504, %v501, 0
        %v527 = vsel %vm504, %v503, 0
        %529 = vmatpush.bf16.xpose.msra.mxu0 0
        %530 = vmatpush.bf16.xpose.msra.mxu0 0
        %531 = vmatpush.bf16.xpose.msra.mxu0 0
        %532 = vmatpush.bf16.xpose.msra.mxu0 0
        %533 = vmatpush.bf16.xpose.msra.mxu0 %v527
        %534 = vmatpush.bf16.xpose.msra.mxu0 %v524
        %535 = vmatpush.bf16.xpose.msra.mxu0 %v521
        %536 = vmatpush.bf16.xpose.msra.mxu0 %v518
        %537 = vmatmul.bf16.gmra.mxu0 %v506
        %v538 = vpop.f32.mrf.mxu0
        %v539 = vadd.f32 %v460, %v538
        %v540 = vpop.f32.mrf.mxu0
        %v541 = vadd.f32 %v461, %v540
        %542 = vmatmul.bf16.gmra.mxu0 %v509
        %v543 = vpop.f32.mrf.mxu0
        %v544 = vadd.f32 %v462, %v543
        %v545 = vpop.f32.mrf.mxu0
        %v546 = vadd.f32 %v463, %v545
        %547 = vmatmul.bf16.gmra.mxu0 %v512
        %v548 = vpop.f32.mrf.mxu0
        %v549 = vadd.f32 %v464, %v548
        %v550 = vpop.f32.mrf.mxu0
        %v551 = vadd.f32 %v465, %v550
        %552 = vmatmul.bf16.gmra.mxu0 %v515
        %v553 = vpop.f32.mrf.mxu0
        %v554 = vadd.f32 %v466, %v553
        %v555 = vpop.f32.mrf.mxu0
        %v556 = vadd.f32 %v467, %v555
        %557 = vdwg.mxu0
        %v566 = vunpack.c.l.b16 %v436
        %v567 = vunpack.c.l.b16 %v437
        %v568 = vunpack.c.l.b16 %v438
        %v569 = vunpack.c.l.b16 %v439
        %v570 = vunpack.c.l.b16 %v440
        %v571 = vunpack.c.l.b16 %v441
        %v572 = vunpack.c.l.b16 %v442
        %v573 = vunpack.c.l.b16 %v443
        %v574 = vpack.c.b16 %v567, %v566
        %v575 = vpack.c.b16 %v569, %v568
        %v576 = vpack.c.b16 %v571, %v570
        %v577 = vpack.c.b16 %v573, %v572
        %578 = vrot.lane.b32.xlu0 %v574, 96
        %v579 = vpop.permute.xlu0 %578
        %580 = vrot.lane.b32.xlu0 %v575, 96
        %v581 = vpop.permute.xlu0 %580
        %582 = vrot.lane.b32.xlu0 %v576, 96
        %v583 = vpop.permute.xlu0 %582
        %584 = vrot.lane.b32.xlu0 %v577, 96
        %v585 = vpop.permute.xlu0 %584
        %v587 = vsel %vm504, %v574, 0
        %v590 = vsel %vm504, %v575, 0
        %v593 = vsel %vm504, %v576, 0
        %v596 = vsel %vm504, %v577, 0
        %v599 = vsel %vm504, %v579, 0
        %v602 = vsel %vm504, %v581, 0
        %v605 = vsel %vm504, %v583, 0
        %v608 = vsel %vm504, %v585, 0
        %610 = vmatpush.bf16.xpose.msra.mxu0 0
        %611 = vmatpush.bf16.xpose.msra.mxu0 0
        %612 = vmatpush.bf16.xpose.msra.mxu0 0
        %613 = vmatpush.bf16.xpose.msra.mxu0 0
        %614 = vmatpush.bf16.xpose.msra.mxu0 %v608
        %615 = vmatpush.bf16.xpose.msra.mxu0 %v605
        %616 = vmatpush.bf16.xpose.msra.mxu0 %v602
        %617 = vmatpush.bf16.xpose.msra.mxu0 %v599
        %618 = vmatmul.bf16.gmra.mxu0 %v587
        %v619 = vpop.f32.mrf.mxu0
        %v620 = vadd.f32 %v468, %v619
        %v621 = vpop.f32.mrf.mxu0
        %v622 = vadd.f32 %v469, %v621
        %623 = vmatmul.bf16.gmra.mxu0 %v590
        %v624 = vpop.f32.mrf.mxu0
        %v625 = vadd.f32 %v470, %v624
        %v626 = vpop.f32.mrf.mxu0
        %v627 = vadd.f32 %v471, %v626
        %628 = vmatmul.bf16.gmra.mxu0 %v593
        %v629 = vpop.f32.mrf.mxu0
        %v630 = vadd.f32 %v472, %v629
        %v631 = vpop.f32.mrf.mxu0
        %v632 = vadd.f32 %v473, %v631
        %633 = vmatmul.bf16.gmra.mxu0 %v596
        %v634 = vpop.f32.mrf.mxu0
        %v635 = vadd.f32 %v474, %v634
        %v636 = vpop.f32.mrf.mxu0
        %v637 = vadd.f32 %v475, %v636
        %638 = vdwg.mxu0
        %vm639 = vcmask 523264
        %v640 = vsel %vm639, %v539, -inf
        %641 = vmax.xlane.f32.xlu0 %v640
        %v642 = vpop.xlane.xlu0 %641
        %v643 = vsel %vm639, %v541, -inf
        %644 = vmax.xlane.f32.xlu0 %v643
        %v645 = vpop.xlane.xlu0 %644
        %v646 = vsel %vm639, %v544, -inf
        %647 = vmax.xlane.f32.xlu0 %v646
        %v648 = vpop.xlane.xlu0 %647
        %v649 = vsel %vm639, %v546, -inf
        %650 = vmax.xlane.f32.xlu0 %v649
        %v651 = vpop.xlane.xlu0 %650
        %v652 = vsel %vm639, %v549, -inf
        %653 = vmax.xlane.f32.xlu0 %v652
        %v654 = vpop.xlane.xlu0 %653
        %v655 = vsel %vm639, %v551, -inf
        %656 = vmax.xlane.f32.xlu0 %v655
        %v657 = vpop.xlane.xlu0 %656
        %v658 = vsel %vm639, %v554, -inf
        %659 = vmax.xlane.f32.xlu0 %v658
        %v660 = vpop.xlane.xlu0 %659
        %v661 = vsel %vm639, %v556, -inf
        %662 = vmax.xlane.f32.xlu0 %v661
        %v663 = vpop.xlane.xlu0 %662
        %v664 = vsel %vm639, %v620, -inf
        %665 = vmax.xlane.f32.xlu0 %v664
        %v666 = vpop.xlane.xlu0 %665
        %v667 = vsel %vm639, %v622, -inf
        %668 = vmax.xlane.f32.xlu0 %v667
        %v669 = vpop.xlane.xlu0 %668
        %v670 = vsel %vm639, %v625, -inf
        %671 = vmax.xlane.f32.xlu0 %v670
        %v672 = vpop.xlane.xlu0 %671
        %v673 = vsel %vm639, %v627, -inf
        %674 = vmax.xlane.f32.xlu0 %v673
        %v675 = vpop.xlane.xlu0 %674
        %v676 = vsel %vm639, %v630, -inf
        %677 = vmax.xlane.f32.xlu0 %v676
        %v678 = vpop.xlane.xlu0 %677
        %v679 = vsel %vm639, %v632, -inf
        %680 = vmax.xlane.f32.xlu0 %v679
        %v681 = vpop.xlane.xlu0 %680
        %v682 = vsel %vm639, %v635, -inf
        %683 = vmax.xlane.f32.xlu0 %v682
        %v684 = vpop.xlane.xlu0 %683
        %v685 = vsel %vm639, %v637, -inf
        %686 = vmax.xlane.f32.xlu0 %v685
        %v687 = vpop.xlane.xlu0 %686
        %v688 = vsub.f32 %v539, %v642
        %v689 = vsub.f32 %v541, %v645
        %v690 = vsub.f32 %v544, %v648
        %v691 = vsub.f32 %v546, %v651
        %v692 = vsub.f32 %v549, %v654
        %v693 = vsub.f32 %v551, %v657
        %v694 = vsub.f32 %v554, %v660
        %v695 = vsub.f32 %v556, %v663
        %v696 = vsub.f32 %v620, %v666
        %v697 = vsub.f32 %v622, %v669
        %v698 = vsub.f32 %v625, %v672
        %v699 = vsub.f32 %v627, %v675
        %v700 = vsub.f32 %v630, %v678
        %v701 = vsub.f32 %v632, %v681
        %v702 = vsub.f32 %v635, %v684
        %v703 = vsub.f32 %v637, %v687
        %v704 = vmul.f32 %v688, 1.442695
        %v705 = vpow.pop %v704
        %v706 = vmul.f32 %v689, 1.442695
        %v707 = vpow.pop %v706
        %v708 = vmul.f32 %v690, 1.442695
        %v709 = vpow.pop %v708
        %v710 = vmul.f32 %v691, 1.442695
        %v711 = vpow.pop %v710
        %v712 = vmul.f32 %v692, 1.442695
        %v713 = vpow.pop %v712
        %v714 = vmul.f32 %v693, 1.442695
        %v715 = vpow.pop %v714
        %v716 = vmul.f32 %v694, 1.442695
        %v717 = vpow.pop %v716
        %v718 = vmul.f32 %v695, 1.442695
        %v719 = vpow.pop %v718
        %v720 = vmul.f32 %v696, 1.442695
        %v721 = vpow.pop %v720
        %v722 = vmul.f32 %v697, 1.442695
        %v723 = vpow.pop %v722
        %v724 = vmul.f32 %v698, 1.442695
        %v725 = vpow.pop %v724
        %v726 = vmul.f32 %v699, 1.442695
        %v727 = vpow.pop %v726
        %v728 = vmul.f32 %v700, 1.442695
        %v729 = vpow.pop %v728
        %v730 = vmul.f32 %v701, 1.442695
        %v731 = vpow.pop %v730
        %v732 = vmul.f32 %v702, 1.442695
        %v733 = vpow.pop %v732
        %v734 = vmul.f32 %v703, 1.442695
        %v735 = vpow.pop %v734
        %v736 = vsel %vm639, %v705, 0.0
        %737 = vadd.xlane.f32.xlu0 %v736
        %v738 = vpop.xlane.xlu0 %737
        %v739 = vsel %vm639, %v707, 0.0
        %740 = vadd.xlane.f32.xlu0 %v739
        %v741 = vpop.xlane.xlu0 %740
        %v742 = vsel %vm639, %v709, 0.0
        %743 = vadd.xlane.f32.xlu0 %v742
        %v744 = vpop.xlane.xlu0 %743
        %v745 = vsel %vm639, %v711, 0.0
        %746 = vadd.xlane.f32.xlu0 %v745
        %v747 = vpop.xlane.xlu0 %746
        %v748 = vsel %vm639, %v713, 0.0
        %749 = vadd.xlane.f32.xlu0 %v748
        %v750 = vpop.xlane.xlu0 %749
        %v751 = vsel %vm639, %v715, 0.0
        %752 = vadd.xlane.f32.xlu0 %v751
        %v753 = vpop.xlane.xlu0 %752
        %v754 = vsel %vm639, %v717, 0.0
        %755 = vadd.xlane.f32.xlu0 %v754
        %v756 = vpop.xlane.xlu0 %755
        %v757 = vsel %vm639, %v719, 0.0
        %758 = vadd.xlane.f32.xlu0 %v757
        %v759 = vpop.xlane.xlu0 %758
        %v760 = vsel %vm639, %v721, 0.0
        %761 = vadd.xlane.f32.xlu0 %v760
        %v762 = vpop.xlane.xlu0 %761
        %v763 = vsel %vm639, %v723, 0.0
        %764 = vadd.xlane.f32.xlu0 %v763
        %v765 = vpop.xlane.xlu0 %764
        %v766 = vsel %vm639, %v725, 0.0
        %767 = vadd.xlane.f32.xlu0 %v766
        %v768 = vpop.xlane.xlu0 %767
        %v769 = vsel %vm639, %v727, 0.0
        %770 = vadd.xlane.f32.xlu0 %v769
        %v771 = vpop.xlane.xlu0 %770
        %v772 = vsel %vm639, %v729, 0.0
        %773 = vadd.xlane.f32.xlu0 %v772
        %v774 = vpop.xlane.xlu0 %773
        %v775 = vsel %vm639, %v731, 0.0
        %776 = vadd.xlane.f32.xlu0 %v775
        %v777 = vpop.xlane.xlu0 %776
        %v778 = vsel %vm639, %v733, 0.0
        %779 = vadd.xlane.f32.xlu0 %v778
        %v780 = vpop.xlane.xlu0 %779
        %v781 = vsel %vm639, %v735, 0.0
        %782 = vadd.xlane.f32.xlu0 %v781
        %v783 = vpop.xlane.xlu0 %782
        %v784 = vrcp.pop %v738
        %v785 = vrcp.pop %v741
        %v786 = vrcp.pop %v744
        %v787 = vrcp.pop %v747
        %v788 = vrcp.pop %v750
        %v789 = vrcp.pop %v753
        %v790 = vrcp.pop %v756
        %v791 = vrcp.pop %v759
        %v792 = vrcp.pop %v762
        %v793 = vrcp.pop %v765
        %v794 = vrcp.pop %v768
        %v795 = vrcp.pop %v771
        %v796 = vrcp.pop %v774
        %v797 = vrcp.pop %v777
        %v798 = vrcp.pop %v780
        %v799 = vrcp.pop %v783
        %v800 = vmul.f32 %v705, %v784
        %v801 = vmul.f32 %v707, %v785
        %v802 = vmul.f32 %v709, %v786
        %v803 = vmul.f32 %v711, %v787
        %v804 = vmul.f32 %v713, %v788
        %v805 = vmul.f32 %v715, %v789
        %v806 = vmul.f32 %v717, %v790
        %v807 = vmul.f32 %v719, %v791
        %v808 = vmul.f32 %v721, %v792
        %v809 = vmul.f32 %v723, %v793
        %v810 = vmul.f32 %v725, %v794
        %v811 = vmul.f32 %v727, %v795
        %v812 = vmul.f32 %v729, %v796
        %v813 = vmul.f32 %v731, %v797
        %v814 = vmul.f32 %v733, %v798
        %v815 = vmul.f32 %v735, %v799
        %v816 = vmax.f32 %v800, 1e-08
        %v817 = vmax.f32 %v801, 1e-08
        %v818 = vmax.f32 %v802, 1e-08
        %v819 = vmax.f32 %v803, 1e-08
        %v820 = vmax.f32 %v804, 1e-08
        %v821 = vmax.f32 %v805, 1e-08
        %v822 = vmax.f32 %v806, 1e-08
        %v823 = vmax.f32 %v807, 1e-08
        %v824 = vmax.f32 %v808, 1e-08
        %v825 = vmax.f32 %v809, 1e-08
        %v826 = vmax.f32 %v810, 1e-08
        %v827 = vmax.f32 %v811, 1e-08
        %v828 = vmax.f32 %v812, 1e-08
        %v829 = vmax.f32 %v813, 1e-08
        %v830 = vmax.f32 %v814, 1e-08
        %v831 = vmax.f32 %v815, 1e-08
        %v832 = vpack.c.bf16 %v816, %v816
        %v833 = vpack.c.bf16 %v817, %v817
        %v834 = vpack.c.bf16 %v818, %v818
        %v835 = vpack.c.bf16 %v819, %v819
        %v836 = vpack.c.bf16 %v820, %v820
        %v837 = vpack.c.bf16 %v821, %v821
        %v838 = vpack.c.bf16 %v822, %v822
        %v839 = vpack.c.bf16 %v823, %v823
        %v840 = vpack.c.bf16 %v824, %v824
        %v841 = vpack.c.bf16 %v825, %v825
        %v842 = vpack.c.bf16 %v826, %v826
        %v843 = vpack.c.bf16 %v827, %v827
        %v844 = vpack.c.bf16 %v828, %v828
        %v845 = vpack.c.bf16 %v829, %v829
        %v846 = vpack.c.bf16 %v830, %v830
        %v847 = vpack.c.bf16 %v831, %v831
        %v856 = vunpack.c.l.b16 %v832
        %v857 = vunpack.c.l.b16 %v833
        %v858 = vunpack.c.l.b16 %v834
        %v859 = vunpack.c.l.b16 %v835
        %v860 = vunpack.c.l.b16 %v836
        %v861 = vunpack.c.l.b16 %v837
        %v862 = vunpack.c.l.b16 %v838
        %v863 = vunpack.c.l.b16 %v839
        %v864 = vpack.c.b16 %v857, %v856
        %v865 = vpack.c.b16 %v859, %v858
        %v866 = vpack.c.b16 %v861, %v860
        %v867 = vpack.c.b16 %v863, %v862
        %868 = vrot.lane.b32.xlu0 %v492, 64
        %v869 = vpop.permute.xlu0 %868
        %870 = vrot.lane.b32.xlu0 %v493, 64
        %v871 = vpop.permute.xlu0 %870
        %872 = vrot.lane.b32.xlu0 %v494, 64
        %v873 = vpop.permute.xlu0 %872
        %874 = vrot.lane.b32.xlu0 %v495, 64
        %v875 = vpop.permute.xlu0 %874
        %v881 = vsel %vm639, %v864, 0
        %v884 = vsel %vm639, %v865, 0
        %v887 = vsel %vm639, %v866, 0
        %v890 = vsel %vm639, %v867, 0
        %892 = vmatpush.bf16.msra.mxu0 0
        %893 = vmatpush.bf16.msra.mxu0 0
        %894 = vmatpush.bf16.msra.mxu0 0
        %895 = vmatpush.bf16.msra.mxu0 0
        %896 = vmatpush.bf16.msra.mxu0 %v875
        %897 = vmatpush.bf16.msra.mxu0 %v873
        %898 = vmatpush.bf16.msra.mxu0 %v871
        %899 = vmatpush.bf16.msra.mxu0 %v869
        %900 = vmatmul.bf16.gmra.mxu0 %v881
        %v901 = vpop.f32.mrf.mxu0
        %v902 = vadd.f32 0.0, %v901
        %v903 = vpop.f32.mrf.mxu0
        %v904 = vadd.f32 0.0, %v903
        %905 = vmatmul.bf16.gmra.mxu0 %v884
        %v906 = vpop.f32.mrf.mxu0
        %v907 = vadd.f32 0.0, %v906
        %v908 = vpop.f32.mrf.mxu0
        %v909 = vadd.f32 0.0, %v908
        %910 = vmatmul.bf16.gmra.mxu0 %v887
        %v911 = vpop.f32.mrf.mxu0
        %v912 = vadd.f32 0.0, %v911
        %v913 = vpop.f32.mrf.mxu0
        %v914 = vadd.f32 0.0, %v913
        %915 = vmatmul.bf16.gmra.mxu0 %v890
        %v916 = vpop.f32.mrf.mxu0
        %v917 = vadd.f32 0.0, %v916
        %v918 = vpop.f32.mrf.mxu0
        %v919 = vadd.f32 0.0, %v918
        %920 = vdwg.mxu0
        %v929 = vunpack.c.l.b16 %v840
        %v930 = vunpack.c.l.b16 %v841
        %v931 = vunpack.c.l.b16 %v842
        %v932 = vunpack.c.l.b16 %v843
        %v933 = vunpack.c.l.b16 %v844
        %v934 = vunpack.c.l.b16 %v845
        %v935 = vunpack.c.l.b16 %v846
        %v936 = vunpack.c.l.b16 %v847
        %v937 = vpack.c.b16 %v930, %v929
        %v938 = vpack.c.b16 %v932, %v931
        %v939 = vpack.c.b16 %v934, %v933
        %v940 = vpack.c.b16 %v936, %v935
        %941 = vrot.lane.b32.xlu0 %v574, 64
        %v942 = vpop.permute.xlu0 %941
        %943 = vrot.lane.b32.xlu0 %v575, 64
        %v944 = vpop.permute.xlu0 %943
        %945 = vrot.lane.b32.xlu0 %v576, 64
        %v946 = vpop.permute.xlu0 %945
        %947 = vrot.lane.b32.xlu0 %v577, 64
        %v948 = vpop.permute.xlu0 %947
        %v954 = vsel %vm639, %v937, 0
        %v957 = vsel %vm639, %v938, 0
        %v960 = vsel %vm639, %v939, 0
        %v963 = vsel %vm639, %v940, 0
        %965 = vmatpush.bf16.msra.mxu0 0
        %966 = vmatpush.bf16.msra.mxu0 0
        %967 = vmatpush.bf16.msra.mxu0 0
        %968 = vmatpush.bf16.msra.mxu0 0
        %969 = vmatpush.bf16.msra.mxu0 %v948
        %970 = vmatpush.bf16.msra.mxu0 %v946
        %971 = vmatpush.bf16.msra.mxu0 %v944
        %972 = vmatpush.bf16.msra.mxu0 %v942
        %973 = vmatmul.bf16.gmra.mxu0 %v954
        %v974 = vpop.f32.mrf.mxu0
        %v975 = vadd.f32 0.0, %v974
        %v976 = vpop.f32.mrf.mxu0
        %v977 = vadd.f32 0.0, %v976
        %978 = vmatmul.bf16.gmra.mxu0 %v957
        %v979 = vpop.f32.mrf.mxu0
        %v980 = vadd.f32 0.0, %v979
        %v981 = vpop.f32.mrf.mxu0
        %v982 = vadd.f32 0.0, %v981
        %983 = vmatmul.bf16.gmra.mxu0 %v960
        %v984 = vpop.f32.mrf.mxu0
        %v985 = vadd.f32 0.0, %v984
        %v986 = vpop.f32.mrf.mxu0
        %v987 = vadd.f32 0.0, %v986
        %988 = vmatmul.bf16.gmra.mxu0 %v963
        %v989 = vpop.f32.mrf.mxu0
        %v990 = vadd.f32 0.0, %v989
        %v991 = vpop.f32.mrf.mxu0
        %v992 = vadd.f32 0.0, %v991
        %993 = vdwg.mxu0
        %v994 = vpack.c.bf16 %v904, %v902
        %v995 = vpack.c.bf16 %v909, %v907
        %v996 = vpack.c.bf16 %v914, %v912
        %v997 = vpack.c.bf16 %v919, %v917
        %v998 = vpack.c.bf16 %v977, %v975
        %v999 = vpack.c.bf16 %v982, %v980
        %v1000 = vpack.c.bf16 %v987, %v985
        %v1001 = vpack.c.bf16 %v992, %v990
        %v1002 = vld [vmem:[%s3] sm:$0xf]
        %s1003 = scalar_lea.vmem [#allocation2], 64
        %v1004 = vld [vmem:[%s1003] sm:$0xf]
        %v1005 = vld [vmem:[%s1003 + $0x4] sm:$0xf]
        %v1006 = vld [vmem:[%s1003 + $0x8] sm:$0xf]
        %v1007 = vld [vmem:[%s1003 + $0xc] sm:$0xf]
        %v1008 = vld [vmem:[%s1003 + $0x10] sm:$0xf]
        %v1009 = vld [vmem:[%s1003 + $0x14] sm:$0xf]
        %v1010 = vld [vmem:[%s1003 + $0x18] sm:$0xf]
        %v1011 = vld [vmem:[%s1003 + $0x1c] sm:$0xf]
        %v1012 = vld [vmem:[%s1003 + $0x20] sm:$0xf]
        %v1013 = vld [vmem:[%s1003 + $0x24] sm:$0xf]
        %v1014 = vld [vmem:[%s1003 + $0x28] sm:$0xf]
        %v1015 = vld [vmem:[%s1003 + $0x2c] sm:$0xf]
        %v1016 = vld [vmem:[%s1003 + $0x30] sm:$0xf]
        %v1017 = vld [vmem:[%s1003 + $0x34] sm:$0xf]
        %v1018 = vld [vmem:[%s1003 + $0x38] sm:$0xf]
        %v1019 = vld [vmem:[%s1003 + $0x3c] sm:$0xf]
        %v1020 = vunpack.c.l.bf16 %v1004
        %v1021 = vunpack.c.l.bf16 %v1005
        %v1022 = vunpack.c.l.bf16 %v1006
        %v1023 = vunpack.c.l.bf16 %v1007
        %v1024 = vunpack.c.l.bf16 %v1008
        %v1025 = vunpack.c.l.bf16 %v1009
        %v1026 = vunpack.c.l.bf16 %v1010
        %v1027 = vunpack.c.l.bf16 %v1011
        %v1028 = vunpack.c.l.bf16 %v1012
        %v1029 = vunpack.c.l.bf16 %v1013
        %v1030 = vunpack.c.l.bf16 %v1014
        %v1031 = vunpack.c.l.bf16 %v1015
        %v1032 = vunpack.c.l.bf16 %v1016
        %v1033 = vunpack.c.l.bf16 %v1017
        %v1034 = vunpack.c.l.bf16 %v1018
        %v1035 = vunpack.c.l.bf16 %v1019
        %1036 = vrot.lane.b32.xlu0 %v492, 120
        %v1037 = vpop.permute.xlu0 %1036
        %1038 = vrot.lane.b32.xlu0 %v493, 120
        %v1039 = vpop.permute.xlu0 %1038
        %1040 = vrot.lane.b32.xlu0 %v494, 120
        %v1041 = vpop.permute.xlu0 %1040
        %1042 = vrot.lane.b32.xlu0 %v495, 120
        %v1043 = vpop.permute.xlu0 %1042
        %1044 = vrot.lane.b32.xlu0 %v492, 88
        %v1045 = vpop.permute.xlu0 %1044
        %1046 = vrot.lane.b32.xlu0 %v493, 88
        %v1047 = vpop.permute.xlu0 %1046
        %1048 = vrot.lane.b32.xlu0 %v494, 88
        %v1049 = vpop.permute.xlu0 %1048
        %1050 = vrot.lane.b32.xlu0 %v495, 88
        %v1051 = vpop.permute.xlu0 %1050
        %v1053 = vsel %vm504, %v1037, 0
        %v1056 = vsel %vm504, %v1039, 0
        %v1059 = vsel %vm504, %v1041, 0
        %v1062 = vsel %vm504, %v1043, 0
        %v1065 = vsel %vm504, %v1045, 0
        %v1068 = vsel %vm504, %v1047, 0
        %v1071 = vsel %vm504, %v1049, 0
        %v1074 = vsel %vm504, %v1051, 0
        %1076 = vmatpush.bf16.xpose.msra.mxu0 0
        %1077 = vmatpush.bf16.xpose.msra.mxu0 0
        %1078 = vmatpush.bf16.xpose.msra.mxu0 0
        %1079 = vmatpush.bf16.xpose.msra.mxu0 0
        %1080 = vmatpush.bf16.xpose.msra.mxu0 %v1074
        %1081 = vmatpush.bf16.xpose.msra.mxu0 %v1071
        %1082 = vmatpush.bf16.xpose.msra.mxu0 %v1068
        %1083 = vmatpush.bf16.xpose.msra.mxu0 %v1065
        %1084 = vmatmul.bf16.gmra.mxu0 %v1053
        %v1085 = vpop.f32.mrf.mxu0
        %v1086 = vadd.f32 %v1020, %v1085
        %v1087 = vpop.f32.mrf.mxu0
        %v1088 = vadd.f32 %v1021, %v1087
        %1089 = vmatmul.bf16.gmra.mxu0 %v1056
        %v1090 = vpop.f32.mrf.mxu0
        %v1091 = vadd.f32 %v1022, %v1090
        %v1092 = vpop.f32.mrf.mxu0
        %v1093 = vadd.f32 %v1023, %v1092
        %1094 = vmatmul.bf16.gmra.mxu0 %v1059
        %v1095 = vpop.f32.mrf.mxu0
        %v1096 = vadd.f32 %v1024, %v1095
        %v1097 = vpop.f32.mrf.mxu0
        %v1098 = vadd.f32 %v1025, %v1097
        %1099 = vmatmul.bf16.gmra.mxu0 %v1062
        %v1100 = vpop.f32.mrf.mxu0
        %v1101 = vadd.f32 %v1026, %v1100
        %v1102 = vpop.f32.mrf.mxu0
        %v1103 = vadd.f32 %v1027, %v1102
        %1104 = vdwg.mxu0
        %1105 = vrot.lane.b32.xlu0 %v574, 120
        %v1106 = vpop.permute.xlu0 %1105
        %1107 = vrot.lane.b32.xlu0 %v575, 120
        %v1108 = vpop.permute.xlu0 %1107
        %1109 = vrot.lane.b32.xlu0 %v576, 120
        %v1110 = vpop.permute.xlu0 %1109
        %1111 = vrot.lane.b32.xlu0 %v577, 120
        %v1112 = vpop.permute.xlu0 %1111
        %1113 = vrot.lane.b32.xlu0 %v574, 88
        %v1114 = vpop.permute.xlu0 %1113
        %1115 = vrot.lane.b32.xlu0 %v575, 88
        %v1116 = vpop.permute.xlu0 %1115
        %1117 = vrot.lane.b32.xlu0 %v576, 88
        %v1118 = vpop.permute.xlu0 %1117
        %1119 = vrot.lane.b32.xlu0 %v577, 88
        %v1120 = vpop.permute.xlu0 %1119
        %v1122 = vsel %vm504, %v1106, 0
        %v1125 = vsel %vm504, %v1108, 0
        %v1128 = vsel %vm504, %v1110, 0
        %v1131 = vsel %vm504, %v1112, 0
        %v1134 = vsel %vm504, %v1114, 0
        %v1137 = vsel %vm504, %v1116, 0
        %v1140 = vsel %vm504, %v1118, 0
        %v1143 = vsel %vm504, %v1120, 0
        %1145 = vmatpush.bf16.xpose.msra.mxu0 0
        %1146 = vmatpush.bf16.xpose.msra.mxu0 0
        %1147 = vmatpush.bf16.xpose.msra.mxu0 0
        %1148 = vmatpush.bf16.xpose.msra.mxu0 0
        %1149 = vmatpush.bf16.xpose.msra.mxu0 %v1143
        %1150 = vmatpush.bf16.xpose.msra.mxu0 %v1140
        %1151 = vmatpush.bf16.xpose.msra.mxu0 %v1137
        %1152 = vmatpush.bf16.xpose.msra.mxu0 %v1134
        %1153 = vmatmul.bf16.gmra.mxu0 %v1122
        %v1154 = vpop.f32.mrf.mxu0
        %v1155 = vadd.f32 %v1028, %v1154
        %v1156 = vpop.f32.mrf.mxu0
        %v1157 = vadd.f32 %v1029, %v1156
        %1158 = vmatmul.bf16.gmra.mxu0 %v1125
        %v1159 = vpop.f32.mrf.mxu0
        %v1160 = vadd.f32 %v1030, %v1159
        %v1161 = vpop.f32.mrf.mxu0
        %v1162 = vadd.f32 %v1031, %v1161
        %1163 = vmatmul.bf16.gmra.mxu0 %v1128
        %v1164 = vpop.f32.mrf.mxu0
        %v1165 = vadd.f32 %v1032, %v1164
        %v1166 = vpop.f32.mrf.mxu0
        %v1167 = vadd.f32 %v1033, %v1166
        %1168 = vmatmul.bf16.gmra.mxu0 %v1131
        %v1169 = vpop.f32.mrf.mxu0
        %v1170 = vadd.f32 %v1034, %v1169
        %v1171 = vpop.f32.mrf.mxu0
        %v1172 = vadd.f32 %v1035, %v1171
        %1173 = vdwg.mxu0
        %v1174 = vsel %vm639, %v1086, -inf
        %1175 = vmax.xlane.f32.xlu0 %v1174
        %v1176 = vpop.xlane.xlu0 %1175
        %v1177 = vsel %vm639, %v1088, -inf
        %1178 = vmax.xlane.f32.xlu0 %v1177
        %v1179 = vpop.xlane.xlu0 %1178
        %v1180 = vsel %vm639, %v1091, -inf
        %1181 = vmax.xlane.f32.xlu0 %v1180
        %v1182 = vpop.xlane.xlu0 %1181
        %v1183 = vsel %vm639, %v1093, -inf
        %1184 = vmax.xlane.f32.xlu0 %v1183
        %v1185 = vpop.xlane.xlu0 %1184
        %v1186 = vsel %vm639, %v1096, -inf
        %1187 = vmax.xlane.f32.xlu0 %v1186
        %v1188 = vpop.xlane.xlu0 %1187
        %v1189 = vsel %vm639, %v1098, -inf
        %1190 = vmax.xlane.f32.xlu0 %v1189
        %v1191 = vpop.xlane.xlu0 %1190
        %v1192 = vsel %vm639, %v1101, -inf
        %1193 = vmax.xlane.f32.xlu0 %v1192
        %v1194 = vpop.xlane.xlu0 %1193
        %v1195 = vsel %vm639, %v1103, -inf
        %1196 = vmax.xlane.f32.xlu0 %v1195
        %v1197 = vpop.xlane.xlu0 %1196
        %v1198 = vsel %vm639, %v1155, -inf
        %1199 = vmax.xlane.f32.xlu0 %v1198
        %v1200 = vpop.xlane.xlu0 %1199
        %v1201 = vsel %vm639, %v1157, -inf
        %1202 = vmax.xlane.f32.xlu0 %v1201
        %v1203 = vpop.xlane.xlu0 %1202
        %v1204 = vsel %vm639, %v1160, -inf
        %1205 = vmax.xlane.f32.xlu0 %v1204
        %v1206 = vpop.xlane.xlu0 %1205
        %v1207 = vsel %vm639, %v1162, -inf
        %1208 = vmax.xlane.f32.xlu0 %v1207
        %v1209 = vpop.xlane.xlu0 %1208
        %v1210 = vsel %vm639, %v1165, -inf
        %1211 = vmax.xlane.f32.xlu0 %v1210
        %v1212 = vpop.xlane.xlu0 %1211
        %v1213 = vsel %vm639, %v1167, -inf
        %1214 = vmax.xlane.f32.xlu0 %v1213
        %v1215 = vpop.xlane.xlu0 %1214
        %v1216 = vsel %vm639, %v1170, -inf
        %1217 = vmax.xlane.f32.xlu0 %v1216
        %v1218 = vpop.xlane.xlu0 %1217
        %v1219 = vsel %vm639, %v1172, -inf
        %1220 = vmax.xlane.f32.xlu0 %v1219
        %v1221 = vpop.xlane.xlu0 %1220
        %v1222 = vsub.f32 %v1086, %v1176
        %v1223 = vsub.f32 %v1088, %v1179
        %v1224 = vsub.f32 %v1091, %v1182
        %v1225 = vsub.f32 %v1093, %v1185
        %v1226 = vsub.f32 %v1096, %v1188
        %v1227 = vsub.f32 %v1098, %v1191
        %v1228 = vsub.f32 %v1101, %v1194
        %v1229 = vsub.f32 %v1103, %v1197
        %v1230 = vsub.f32 %v1155, %v1200
        %v1231 = vsub.f32 %v1157, %v1203
        %v1232 = vsub.f32 %v1160, %v1206
        %v1233 = vsub.f32 %v1162, %v1209
        %v1234 = vsub.f32 %v1165, %v1212
        %v1235 = vsub.f32 %v1167, %v1215
        %v1236 = vsub.f32 %v1170, %v1218
        %v1237 = vsub.f32 %v1172, %v1221
        %v1238 = vmul.f32 %v1222, 1.442695
        %v1239 = vpow.pop %v1238
        %v1240 = vmul.f32 %v1223, 1.442695
        %v1241 = vpow.pop %v1240
        %v1242 = vmul.f32 %v1224, 1.442695
        %v1243 = vpow.pop %v1242
        %v1244 = vmul.f32 %v1225, 1.442695
        %v1245 = vpow.pop %v1244
        %v1246 = vmul.f32 %v1226, 1.442695
        %v1247 = vpow.pop %v1246
        %v1248 = vmul.f32 %v1227, 1.442695
        %v1249 = vpow.pop %v1248
        %v1250 = vmul.f32 %v1228, 1.442695
        %v1251 = vpow.pop %v1250
        %v1252 = vmul.f32 %v1229, 1.442695
        %v1253 = vpow.pop %v1252
        %v1254 = vmul.f32 %v1230, 1.442695
        %v1255 = vpow.pop %v1254
        %v1256 = vmul.f32 %v1231, 1.442695
        %v1257 = vpow.pop %v1256
        %v1258 = vmul.f32 %v1232, 1.442695
        %v1259 = vpow.pop %v1258
        %v1260 = vmul.f32 %v1233, 1.442695
        %v1261 = vpow.pop %v1260
        %v1262 = vmul.f32 %v1234, 1.442695
        %v1263 = vpow.pop %v1262
        %v1264 = vmul.f32 %v1235, 1.442695
        %v1265 = vpow.pop %v1264
        %v1266 = vmul.f32 %v1236, 1.442695
        %v1267 = vpow.pop %v1266
        %v1268 = vmul.f32 %v1237, 1.442695
        %v1269 = vpow.pop %v1268
        %v1270 = vsel %vm639, %v1239, 0.0
        %1271 = vadd.xlane.f32.xlu0 %v1270
        %v1272 = vpop.xlane.xlu0 %1271
        %v1273 = vsel %vm639, %v1241, 0.0
        %1274 = vadd.xlane.f32.xlu0 %v1273
        %v1275 = vpop.xlane.xlu0 %1274
        %v1276 = vsel %vm639, %v1243, 0.0
        %1277 = vadd.xlane.f32.xlu0 %v1276
        %v1278 = vpop.xlane.xlu0 %1277
        %v1279 = vsel %vm639, %v1245, 0.0
        %1280 = vadd.xlane.f32.xlu0 %v1279
        %v1281 = vpop.xlane.xlu0 %1280
        %v1282 = vsel %vm639, %v1247, 0.0
        %1283 = vadd.xlane.f32.xlu0 %v1282
        %v1284 = vpop.xlane.xlu0 %1283
        %v1285 = vsel %vm639, %v1249, 0.0
        %1286 = vadd.xlane.f32.xlu0 %v1285
        %v1287 = vpop.xlane.xlu0 %1286
        %v1288 = vsel %vm639, %v1251, 0.0
        %1289 = vadd.xlane.f32.xlu0 %v1288
        %v1290 = vpop.xlane.xlu0 %1289
        %v1291 = vsel %vm639, %v1253, 0.0
        %1292 = vadd.xlane.f32.xlu0 %v1291
        %v1293 = vpop.xlane.xlu0 %1292
        %v1294 = vsel %vm639, %v1255, 0.0
        %1295 = vadd.xlane.f32.xlu0 %v1294
        %v1296 = vpop.xlane.xlu0 %1295
        %v1297 = vsel %vm639, %v1257, 0.0
        %1298 = vadd.xlane.f32.xlu0 %v1297
        %v1299 = vpop.xlane.xlu0 %1298
        %v1300 = vsel %vm639, %v1259, 0.0
        %1301 = vadd.xlane.f32.xlu0 %v1300
        %v1302 = vpop.xlane.xlu0 %1301
        %v1303 = vsel %vm639, %v1261, 0.0
        %1304 = vadd.xlane.f32.xlu0 %v1303
        %v1305 = vpop.xlane.xlu0 %1304
        %v1306 = vsel %vm639, %v1263, 0.0
        %1307 = vadd.xlane.f32.xlu0 %v1306
        %v1308 = vpop.xlane.xlu0 %1307
        %v1309 = vsel %vm639, %v1265, 0.0
        %1310 = vadd.xlane.f32.xlu0 %v1309
        %v1311 = vpop.xlane.xlu0 %1310
        %v1312 = vsel %vm639, %v1267, 0.0
        %1313 = vadd.xlane.f32.xlu0 %v1312
        %v1314 = vpop.xlane.xlu0 %1313
        %v1315 = vsel %vm639, %v1269, 0.0
        %1316 = vadd.xlane.f32.xlu0 %v1315
        %v1317 = vpop.xlane.xlu0 %1316
        %v1318 = vrcp.pop %v1272
        %v1319 = vrcp.pop %v1275
        %v1320 = vrcp.pop %v1278
        %v1321 = vrcp.pop %v1281
        %v1322 = vrcp.pop %v1284
        %v1323 = vrcp.pop %v1287
        %v1324 = vrcp.pop %v1290
        %v1325 = vrcp.pop %v1293
        %v1326 = vrcp.pop %v1296
        %v1327 = vrcp.pop %v1299
        %v1328 = vrcp.pop %v1302
        %v1329 = vrcp.pop %v1305
        %v1330 = vrcp.pop %v1308
        %v1331 = vrcp.pop %v1311
        %v1332 = vrcp.pop %v1314
        %v1333 = vrcp.pop %v1317
        %v1334 = vmul.f32 %v1239, %v1318
        %v1335 = vmul.f32 %v1241, %v1319
        %v1336 = vmul.f32 %v1243, %v1320
        %v1337 = vmul.f32 %v1245, %v1321
        %v1338 = vmul.f32 %v1247, %v1322
        %v1339 = vmul.f32 %v1249, %v1323
        %v1340 = vmul.f32 %v1251, %v1324
        %v1341 = vmul.f32 %v1253, %v1325
        %v1342 = vmul.f32 %v1255, %v1326
        %v1343 = vmul.f32 %v1257, %v1327
        %v1344 = vmul.f32 %v1259, %v1328
        %v1345 = vmul.f32 %v1261, %v1329
        %v1346 = vmul.f32 %v1263, %v1330
        %v1347 = vmul.f32 %v1265, %v1331
        %v1348 = vmul.f32 %v1267, %v1332
        %v1349 = vmul.f32 %v1269, %v1333
        %v1350 = vmax.f32 %v1334, 1e-08
        %v1351 = vmax.f32 %v1335, 1e-08
        %v1352 = vmax.f32 %v1336, 1e-08
        %v1353 = vmax.f32 %v1337, 1e-08
        %v1354 = vmax.f32 %v1338, 1e-08
        %v1355 = vmax.f32 %v1339, 1e-08
        %v1356 = vmax.f32 %v1340, 1e-08
        %v1357 = vmax.f32 %v1341, 1e-08
        %v1358 = vmax.f32 %v1342, 1e-08
        %v1359 = vmax.f32 %v1343, 1e-08
        %v1360 = vmax.f32 %v1344, 1e-08
        %v1361 = vmax.f32 %v1345, 1e-08
        %v1362 = vmax.f32 %v1346, 1e-08
        %v1363 = vmax.f32 %v1347, 1e-08
        %v1364 = vmax.f32 %v1348, 1e-08
        %v1365 = vmax.f32 %v1349, 1e-08
        %v1366 = vpack.c.bf16 %v1350, %v1350
        %v1367 = vpack.c.bf16 %v1351, %v1351
        %v1368 = vpack.c.bf16 %v1352, %v1352
        %v1369 = vpack.c.bf16 %v1353, %v1353
        %v1370 = vpack.c.bf16 %v1354, %v1354
        %v1371 = vpack.c.bf16 %v1355, %v1355
        %v1372 = vpack.c.bf16 %v1356, %v1356
        %v1373 = vpack.c.bf16 %v1357, %v1357
        %v1374 = vpack.c.bf16 %v1358, %v1358
        %v1375 = vpack.c.bf16 %v1359, %v1359
        %v1376 = vpack.c.bf16 %v1360, %v1360
        %v1377 = vpack.c.bf16 %v1361, %v1361
        %v1378 = vpack.c.bf16 %v1362, %v1362
        %v1379 = vpack.c.bf16 %v1363, %v1363
        %v1380 = vpack.c.bf16 %v1364, %v1364
        %v1381 = vpack.c.bf16 %v1365, %v1365
        %v1390 = vunpack.c.l.b16 %v1366
        %v1391 = vunpack.c.l.b16 %v1367
        %v1392 = vunpack.c.l.b16 %v1368
        %v1393 = vunpack.c.l.b16 %v1369
        %v1394 = vunpack.c.l.b16 %v1370
        %v1395 = vunpack.c.l.b16 %v1371
        %v1396 = vunpack.c.l.b16 %v1372
        %v1397 = vunpack.c.l.b16 %v1373
        %v1398 = vpack.c.b16 %v1391, %v1390
        %v1399 = vpack.c.b16 %v1393, %v1392
        %v1400 = vpack.c.b16 %v1395, %v1394
        %v1401 = vpack.c.b16 %v1397, %v1396
        %1402 = vrot.lane.b32.xlu0 %v492, 56
        %v1403 = vpop.permute.xlu0 %1402
        %1404 = vrot.lane.b32.xlu0 %v493, 56
        %v1405 = vpop.permute.xlu0 %1404
        %1406 = vrot.lane.b32.xlu0 %v494, 56
        %v1407 = vpop.permute.xlu0 %1406
        %1408 = vrot.lane.b32.xlu0 %v495, 56
        %v1409 = vpop.permute.xlu0 %1408
        %v1415 = vsel %vm639, %v1398, 0
        %v1418 = vsel %vm639, %v1399, 0
        %v1421 = vsel %vm639, %v1400, 0
        %v1424 = vsel %vm639, %v1401, 0
        %1426 = vmatpush.bf16.msra.mxu0 0
        %1427 = vmatpush.bf16.msra.mxu0 0
        %1428 = vmatpush.bf16.msra.mxu0 0
        %1429 = vmatpush.bf16.msra.mxu0 0
        %1430 = vmatpush.bf16.msra.mxu0 %v1409
        %1431 = vmatpush.bf16.msra.mxu0 %v1407
        %1432 = vmatpush.bf16.msra.mxu0 %v1405
        %1433 = vmatpush.bf16.msra.mxu0 %v1403
        %1434 = vmatmul.bf16.gmra.mxu0 %v1415
        %v1435 = vpop.f32.mrf.mxu0
        %v1436 = vadd.f32 0.0, %v1435
        %v1437 = vpop.f32.mrf.mxu0
        %v1438 = vadd.f32 0.0, %v1437
        %1439 = vmatmul.bf16.gmra.mxu0 %v1418
        %v1440 = vpop.f32.mrf.mxu0
        %v1441 = vadd.f32 0.0, %v1440
        %v1442 = vpop.f32.mrf.mxu0
        %v1443 = vadd.f32 0.0, %v1442
        %1444 = vmatmul.bf16.gmra.mxu0 %v1421
        %v1445 = vpop.f32.mrf.mxu0
        %v1446 = vadd.f32 0.0, %v1445
        %v1447 = vpop.f32.mrf.mxu0
        %v1448 = vadd.f32 0.0, %v1447
        %1449 = vmatmul.bf16.gmra.mxu0 %v1424
        %v1450 = vpop.f32.mrf.mxu0
        %v1451 = vadd.f32 0.0, %v1450
        %v1452 = vpop.f32.mrf.mxu0
        %v1453 = vadd.f32 0.0, %v1452
        %1454 = vdwg.mxu0
        %v1463 = vunpack.c.l.b16 %v1374
        %v1464 = vunpack.c.l.b16 %v1375
        %v1465 = vunpack.c.l.b16 %v1376
        %v1466 = vunpack.c.l.b16 %v1377
        %v1467 = vunpack.c.l.b16 %v1378
        %v1468 = vunpack.c.l.b16 %v1379
        %v1469 = vunpack.c.l.b16 %v1380
        %v1470 = vunpack.c.l.b16 %v1381
        %v1471 = vpack.c.b16 %v1464, %v1463
        %v1472 = vpack.c.b16 %v1466, %v1465
        %v1473 = vpack.c.b16 %v1468, %v1467
        %v1474 = vpack.c.b16 %v1470, %v1469
        %1475 = vrot.lane.b32.xlu0 %v574, 56
        %v1476 = vpop.permute.xlu0 %1475
        %1477 = vrot.lane.b32.xlu0 %v575, 56
        %v1478 = vpop.permute.xlu0 %1477
        %1479 = vrot.lane.b32.xlu0 %v576, 56
        %v1480 = vpop.permute.xlu0 %1479
        %1481 = vrot.lane.b32.xlu0 %v577, 56
        %v1482 = vpop.permute.xlu0 %1481
        %v1488 = vsel %vm639, %v1471, 0
        %v1491 = vsel %vm639, %v1472, 0
        %v1494 = vsel %vm639, %v1473, 0
        %v1497 = vsel %vm639, %v1474, 0
        %1499 = vmatpush.bf16.msra.mxu0 0
        %1500 = vmatpush.bf16.msra.mxu0 0
        %1501 = vmatpush.bf16.msra.mxu0 0
        %1502 = vmatpush.bf16.msra.mxu0 0
        %1503 = vmatpush.bf16.msra.mxu0 %v1482
        %1504 = vmatpush.bf16.msra.mxu0 %v1480
        %1505 = vmatpush.bf16.msra.mxu0 %v1478
        %1506 = vmatpush.bf16.msra.mxu0 %v1476
        %1507 = vmatmul.bf16.gmra.mxu0 %v1488
        %v1508 = vpop.f32.mrf.mxu0
        %v1509 = vadd.f32 0.0, %v1508
        %v1510 = vpop.f32.mrf.mxu0
        %v1511 = vadd.f32 0.0, %v1510
        %1512 = vmatmul.bf16.gmra.mxu0 %v1491
        %v1513 = vpop.f32.mrf.mxu0
        %v1514 = vadd.f32 0.0, %v1513
        %v1515 = vpop.f32.mrf.mxu0
        %v1516 = vadd.f32 0.0, %v1515
        %1517 = vmatmul.bf16.gmra.mxu0 %v1494
        %v1518 = vpop.f32.mrf.mxu0
        %v1519 = vadd.f32 0.0, %v1518
        %v1520 = vpop.f32.mrf.mxu0
        %v1521 = vadd.f32 0.0, %v1520
        %1522 = vmatmul.bf16.gmra.mxu0 %v1497
        %v1523 = vpop.f32.mrf.mxu0
        %v1524 = vadd.f32 0.0, %v1523
        %v1525 = vpop.f32.mrf.mxu0
        %v1526 = vadd.f32 0.0, %v1525
        %1527 = vdwg.mxu0
        %v1528 = vpack.c.bf16 %v1438, %v1436
        %v1529 = vpack.c.bf16 %v1443, %v1441
        %v1530 = vpack.c.bf16 %v1448, %v1446
        %v1531 = vpack.c.bf16 %v1453, %v1451
        %v1532 = vpack.c.bf16 %v1511, %v1509
        %v1533 = vpack.c.bf16 %v1516, %v1514
        %v1534 = vpack.c.bf16 %v1521, %v1519
        %v1535 = vpack.c.bf16 %v1526, %v1524
        %s1536 = scalar_lea.vmem %s3, 4
        %v1537 = vld [vmem:[%s1536] sm:$0xf]
        %v1539 = vsel %vm504, %v1528, 0
        %v1542 = vsel %vm504, %v1529, 0
        %v1545 = vsel %vm504, %v1530, 0
        %v1548 = vsel %vm504, %v1531, 0
        %v1551 = vsel %vm504, %v1532, 0
        %v1554 = vsel %vm504, %v1533, 0
        %v1557 = vsel %vm504, %v1534, 0
        %v1560 = vsel %vm504, %v1535, 0
        %vm1562 = vcmask 1043456
        %v1564 = vsel %vm1562, %v1537, 0
        %1566 = vmatpush.bf16.msra.mxu0 0
        %1567 = vmatpush.bf16.msra.mxu0 0
        %1568 = vmatpush.bf16.msra.mxu0 0
        %1569 = vmatpush.bf16.msra.mxu0 0
        %1570 = vmatpush.bf16.msra.mxu0 0
        %1571 = vmatpush.bf16.msra.mxu0 0
        %1572 = vmatpush.bf16.msra.mxu0 0
        %1573 = vmatpush.bf16.msra.mxu0 %v1564
        %1574 = vmatmul.bf16.gmra.mxu0 %v1539
        %v1575 = vpop.f32.mrf.mxu0
        %v1576 = vadd.f32 0.0, %v1575
        %v1577 = vpop.f32.mrf.mxu0
        %v1578 = vadd.f32 0.0, %v1577
        %1579 = vmatmul.bf16.gmra.mxu0 %v1542
        %v1580 = vpop.f32.mrf.mxu0
        %v1581 = vadd.f32 0.0, %v1580
        %v1582 = vpop.f32.mrf.mxu0
        %v1583 = vadd.f32 0.0, %v1582
        %1584 = vmatmul.bf16.gmra.mxu0 %v1545
        %v1585 = vpop.f32.mrf.mxu0
        %v1586 = vadd.f32 0.0, %v1585
        %v1587 = vpop.f32.mrf.mxu0
        %v1588 = vadd.f32 0.0, %v1587
        %1589 = vmatmul.bf16.gmra.mxu0 %v1548
        %v1590 = vpop.f32.mrf.mxu0
        %v1591 = vadd.f32 0.0, %v1590
        %v1592 = vpop.f32.mrf.mxu0
        %v1593 = vadd.f32 0.0, %v1592
        %1594 = vmatmul.bf16.gmra.mxu0 %v1551
        %v1595 = vpop.f32.mrf.mxu0
        %v1596 = vadd.f32 0.0, %v1595
        %v1597 = vpop.f32.mrf.mxu0
        %v1598 = vadd.f32 0.0, %v1597
        %1599 = vmatmul.bf16.gmra.mxu0 %v1554
        %v1600 = vpop.f32.mrf.mxu0
        %v1601 = vadd.f32 0.0, %v1600
        %v1602 = vpop.f32.mrf.mxu0
        %v1603 = vadd.f32 0.0, %v1602
        %1604 = vmatmul.bf16.gmra.mxu0 %v1557
        %v1605 = vpop.f32.mrf.mxu0
        %v1606 = vadd.f32 0.0, %v1605
        %v1607 = vpop.f32.mrf.mxu0
        %v1608 = vadd.f32 0.0, %v1607
        %1609 = vmatmul.bf16.gmra.mxu0 %v1560
        %v1610 = vpop.f32.mrf.mxu0
        %v1611 = vadd.f32 0.0, %v1610
        %v1612 = vpop.f32.mrf.mxu0
        %v1613 = vadd.f32 0.0, %v1612
        %1614 = vdwg.mxu0
        %v1616 = vsel %vm504, %v994, 0
        %v1619 = vsel %vm504, %v995, 0
        %v1622 = vsel %vm504, %v996, 0
        %v1625 = vsel %vm504, %v997, 0
        %v1628 = vsel %vm504, %v998, 0
        %v1631 = vsel %vm504, %v999, 0
        %v1634 = vsel %vm504, %v1000, 0
        %v1637 = vsel %vm504, %v1001, 0
        %v1640 = vsel %vm1562, %v1002, 0
        %1642 = vmatpush.bf16.msra.mxu0 0
        %1643 = vmatpush.bf16.msra.mxu0 0
        %1644 = vmatpush.bf16.msra.mxu0 0
        %1645 = vmatpush.bf16.msra.mxu0 0
        %1646 = vmatpush.bf16.msra.mxu0 0
        %1647 = vmatpush.bf16.msra.mxu0 0
        %1648 = vmatpush.bf16.msra.mxu0 0
        %1649 = vmatpush.bf16.msra.mxu0 %v1640
        %1650 = vmatmul.bf16.gmra.mxu0 %v1616
        %v1651 = vpop.f32.mrf.mxu0
        %v1652 = vadd.f32 %v1576, %v1651
        %v1653 = vpop.f32.mrf.mxu0
        %v1654 = vadd.f32 %v1578, %v1653
        %1655 = vmatmul.bf16.gmra.mxu0 %v1619
        %v1656 = vpop.f32.mrf.mxu0
        %v1657 = vadd.f32 %v1581, %v1656
        %v1658 = vpop.f32.mrf.mxu0
        %v1659 = vadd.f32 %v1583, %v1658
        %1660 = vmatmul.bf16.gmra.mxu0 %v1622
        %v1661 = vpop.f32.mrf.mxu0
        %v1662 = vadd.f32 %v1586, %v1661
        %v1663 = vpop.f32.mrf.mxu0
        %v1664 = vadd.f32 %v1588, %v1663
        %1665 = vmatmul.bf16.gmra.mxu0 %v1625
        %v1666 = vpop.f32.mrf.mxu0
        %v1667 = vadd.f32 %v1591, %v1666
        %v1668 = vpop.f32.mrf.mxu0
        %v1669 = vadd.f32 %v1593, %v1668
        %1670 = vmatmul.bf16.gmra.mxu0 %v1628
        %v1671 = vpop.f32.mrf.mxu0
        %v1672 = vadd.f32 %v1596, %v1671
        %v1673 = vpop.f32.mrf.mxu0
        %v1674 = vadd.f32 %v1598, %v1673
        %1675 = vmatmul.bf16.gmra.mxu0 %v1631
        %v1676 = vpop.f32.mrf.mxu0
        %v1677 = vadd.f32 %v1601, %v1676
        %v1678 = vpop.f32.mrf.mxu0
        %v1679 = vadd.f32 %v1603, %v1678
        %1680 = vmatmul.bf16.gmra.mxu0 %v1634
        %v1681 = vpop.f32.mrf.mxu0
        %v1682 = vadd.f32 %v1606, %v1681
        %v1683 = vpop.f32.mrf.mxu0
        %v1684 = vadd.f32 %v1608, %v1683
        %1685 = vmatmul.bf16.gmra.mxu0 %v1637
        %v1686 = vpop.f32.mrf.mxu0
        %v1687 = vadd.f32 %v1611, %v1686
        %v1688 = vpop.f32.mrf.mxu0
        %v1689 = vadd.f32 %v1613, %v1688
        %1690 = vdwg.mxu0
        %s1691 = scalar_lea.vmem [#allocation2], 128
        %v1692 = vld [vmem:[%s1691] sm:$0xf]
        %v1693 = vld [vmem:[%s1691 + $0x4] sm:$0xf]
        %v1694 = vld [vmem:[%s1691 + $0x8] sm:$0xf]
        %v1695 = vld [vmem:[%s1691 + $0xc] sm:$0xf]
        %v1696 = vld [vmem:[%s1691 + $0x10] sm:$0xf]
        %v1697 = vld [vmem:[%s1691 + $0x14] sm:$0xf]
        %v1698 = vld [vmem:[%s1691 + $0x18] sm:$0xf]
        %v1699 = vld [vmem:[%s1691 + $0x1c] sm:$0xf]
        %v1700 = vld [vmem:[%s1691 + $0x20] sm:$0xf]
        %v1701 = vld [vmem:[%s1691 + $0x24] sm:$0xf]
        %v1702 = vld [vmem:[%s1691 + $0x28] sm:$0xf]
        %v1703 = vld [vmem:[%s1691 + $0x2c] sm:$0xf]
        %v1704 = vld [vmem:[%s1691 + $0x30] sm:$0xf]
        %v1705 = vld [vmem:[%s1691 + $0x34] sm:$0xf]
        %v1706 = vld [vmem:[%s1691 + $0x38] sm:$0xf]
        %v1707 = vld [vmem:[%s1691 + $0x3c] sm:$0xf]
        %v1708 = vunpack.c.l.bf16 %v1692
        %v1709 = vunpack.c.l.bf16 %v1693
        %v1710 = vunpack.c.l.bf16 %v1694
        %v1711 = vunpack.c.l.bf16 %v1695
        %v1712 = vunpack.c.l.bf16 %v1696
        %v1713 = vunpack.c.l.bf16 %v1697
        %v1714 = vunpack.c.l.bf16 %v1698
        %v1715 = vunpack.c.l.bf16 %v1699
        %v1716 = vunpack.c.l.bf16 %v1700
        %v1717 = vunpack.c.l.bf16 %v1701
        %v1718 = vunpack.c.l.bf16 %v1702
        %v1719 = vunpack.c.l.bf16 %v1703
        %v1720 = vunpack.c.l.bf16 %v1704
        %v1721 = vunpack.c.l.bf16 %v1705
        %v1722 = vunpack.c.l.bf16 %v1706
        %v1723 = vunpack.c.l.bf16 %v1707
        %1724 = vrot.lane.b32.xlu0 %v492, 112
        %v1725 = vpop.permute.xlu0 %1724
        %1726 = vrot.lane.b32.xlu0 %v493, 112
        %v1727 = vpop.permute.xlu0 %1726
        %1728 = vrot.lane.b32.xlu0 %v494, 112
        %v1729 = vpop.permute.xlu0 %1728
        %1730 = vrot.lane.b32.xlu0 %v495, 112
        %v1731 = vpop.permute.xlu0 %1730
        %1732 = vrot.lane.b32.xlu0 %v492, 80
        %v1733 = vpop.permute.xlu0 %1732
        %1734 = vrot.lane.b32.xlu0 %v493, 80
        %v1735 = vpop.permute.xlu0 %1734
        %1736 = vrot.lane.b32.xlu0 %v494, 80
        %v1737 = vpop.permute.xlu0 %1736
        %1738 = vrot.lane.b32.xlu0 %v495, 80
        %v1739 = vpop.permute.xlu0 %1738
        %v1741 = vsel %vm504, %v1725, 0
        %v1744 = vsel %vm504, %v1727, 0
        %v1747 = vsel %vm504, %v1729, 0
        %v1750 = vsel %vm504, %v1731, 0
        %v1753 = vsel %vm504, %v1733, 0
        %v1756 = vsel %vm504, %v1735, 0
        %v1759 = vsel %vm504, %v1737, 0
        %v1762 = vsel %vm504, %v1739, 0
        %1764 = vmatpush.bf16.xpose.msra.mxu0 0
        %1765 = vmatpush.bf16.xpose.msra.mxu0 0
        %1766 = vmatpush.bf16.xpose.msra.mxu0 0
        %1767 = vmatpush.bf16.xpose.msra.mxu0 0
        %1768 = vmatpush.bf16.xpose.msra.mxu0 %v1762
        %1769 = vmatpush.bf16.xpose.msra.mxu0 %v1759
        %1770 = vmatpush.bf16.xpose.msra.mxu0 %v1756
        %1771 = vmatpush.bf16.xpose.msra.mxu0 %v1753
        %1772 = vmatmul.bf16.gmra.mxu0 %v1741
        %v1773 = vpop.f32.mrf.mxu0
        %v1774 = vadd.f32 %v1708, %v1773
        %v1775 = vpop.f32.mrf.mxu0
        %v1776 = vadd.f32 %v1709, %v1775
        %1777 = vmatmul.bf16.gmra.mxu0 %v1744
        %v1778 = vpop.f32.mrf.mxu0
        %v1779 = vadd.f32 %v1710, %v1778
        %v1780 = vpop.f32.mrf.mxu0
        %v1781 = vadd.f32 %v1711, %v1780
        %1782 = vmatmul.bf16.gmra.mxu0 %v1747
        %v1783 = vpop.f32.mrf.mxu0
        %v1784 = vadd.f32 %v1712, %v1783
        %v1785 = vpop.f32.mrf.mxu0
        %v1786 = vadd.f32 %v1713, %v1785
        %1787 = vmatmul.bf16.gmra.mxu0 %v1750
        %v1788 = vpop.f32.mrf.mxu0
        %v1789 = vadd.f32 %v1714, %v1788
        %v1790 = vpop.f32.mrf.mxu0
        %v1791 = vadd.f32 %v1715, %v1790
        %1792 = vdwg.mxu0
        %1793 = vrot.lane.b32.xlu0 %v574, 112
        %v1794 = vpop.permute.xlu0 %1793
        %1795 = vrot.lane.b32.xlu0 %v575, 112
        %v1796 = vpop.permute.xlu0 %1795
        %1797 = vrot.lane.b32.xlu0 %v576, 112
        %v1798 = vpop.permute.xlu0 %1797
        %1799 = vrot.lane.b32.xlu0 %v577, 112
        %v1800 = vpop.permute.xlu0 %1799
        %1801 = vrot.lane.b32.xlu0 %v574, 80
        %v1802 = vpop.permute.xlu0 %1801
        %1803 = vrot.lane.b32.xlu0 %v575, 80
        %v1804 = vpop.permute.xlu0 %1803
        %1805 = vrot.lane.b32.xlu0 %v576, 80
        %v1806 = vpop.permute.xlu0 %1805
        %1807 = vrot.lane.b32.xlu0 %v577, 80
        %v1808 = vpop.permute.xlu0 %1807
        %v1810 = vsel %vm504, %v1794, 0
        %v1813 = vsel %vm504, %v1796, 0
        %v1816 = vsel %vm504, %v1798, 0
        %v1819 = vsel %vm504, %v1800, 0
        %v1822 = vsel %vm504, %v1802, 0
        %v1825 = vsel %vm504, %v1804, 0
        %v1828 = vsel %vm504, %v1806, 0
        %v1831 = vsel %vm504, %v1808, 0
        %1833 = vmatpush.bf16.xpose.msra.mxu0 0
        %1834 = vmatpush.bf16.xpose.msra.mxu0 0
        %1835 = vmatpush.bf16.xpose.msra.mxu0 0
        %1836 = vmatpush.bf16.xpose.msra.mxu0 0
        %1837 = vmatpush.bf16.xpose.msra.mxu0 %v1831
        %1838 = vmatpush.bf16.xpose.msra.mxu0 %v1828
        %1839 = vmatpush.bf16.xpose.msra.mxu0 %v1825
        %1840 = vmatpush.bf16.xpose.msra.mxu0 %v1822
        %1841 = vmatmul.bf16.gmra.mxu0 %v1810
        %v1842 = vpop.f32.mrf.mxu0
        %v1843 = vadd.f32 %v1716, %v1842
        %v1844 = vpop.f32.mrf.mxu0
        %v1845 = vadd.f32 %v1717, %v1844
        %1846 = vmatmul.bf16.gmra.mxu0 %v1813
        %v1847 = vpop.f32.mrf.mxu0
        %v1848 = vadd.f32 %v1718, %v1847
        %v1849 = vpop.f32.mrf.mxu0
        %v1850 = vadd.f32 %v1719, %v1849
        %1851 = vmatmul.bf16.gmra.mxu0 %v1816
        %v1852 = vpop.f32.mrf.mxu0
        %v1853 = vadd.f32 %v1720, %v1852
        %v1854 = vpop.f32.mrf.mxu0
        %v1855 = vadd.f32 %v1721, %v1854
        %1856 = vmatmul.bf16.gmra.mxu0 %v1819
        %v1857 = vpop.f32.mrf.mxu0
        %v1858 = vadd.f32 %v1722, %v1857
        %v1859 = vpop.f32.mrf.mxu0
        %v1860 = vadd.f32 %v1723, %v1859
        %1861 = vdwg.mxu0
        %v1862 = vsel %vm639, %v1774, -inf
        %1863 = vmax.xlane.f32.xlu0 %v1862
        %v1864 = vpop.xlane.xlu0 %1863
        %v1865 = vsel %vm639, %v1776, -inf
        %1866 = vmax.xlane.f32.xlu0 %v1865
        %v1867 = vpop.xlane.xlu0 %1866
        %v1868 = vsel %vm639, %v1779, -inf
        %1869 = vmax.xlane.f32.xlu0 %v1868
        %v1870 = vpop.xlane.xlu0 %1869
        %v1871 = vsel %vm639, %v1781, -inf
        %1872 = vmax.xlane.f32.xlu0 %v1871
        %v1873 = vpop.xlane.xlu0 %1872
        %v1874 = vsel %vm639, %v1784, -inf
        %1875 = vmax.xlane.f32.xlu0 %v1874
        %v1876 = vpop.xlane.xlu0 %1875
        %v1877 = vsel %vm639, %v1786, -inf
        %1878 = vmax.xlane.f32.xlu0 %v1877
        %v1879 = vpop.xlane.xlu0 %1878
        %v1880 = vsel %vm639, %v1789, -inf
        %1881 = vmax.xlane.f32.xlu0 %v1880
        %v1882 = vpop.xlane.xlu0 %1881
        %v1883 = vsel %vm639, %v1791, -inf
        %1884 = vmax.xlane.f32.xlu0 %v1883
        %v1885 = vpop.xlane.xlu0 %1884
        %v1886 = vsel %vm639, %v1843, -inf
        %1887 = vmax.xlane.f32.xlu0 %v1886
        %v1888 = vpop.xlane.xlu0 %1887
        %v1889 = vsel %vm639, %v1845, -inf
        %1890 = vmax.xlane.f32.xlu0 %v1889
        %v1891 = vpop.xlane.xlu0 %1890
        %v1892 = vsel %vm639, %v1848, -inf
        %1893 = vmax.xlane.f32.xlu0 %v1892
        %v1894 = vpop.xlane.xlu0 %1893
        %v1895 = vsel %vm639, %v1850, -inf
        %1896 = vmax.xlane.f32.xlu0 %v1895
        %v1897 = vpop.xlane.xlu0 %1896
        %v1898 = vsel %vm639, %v1853, -inf
        %1899 = vmax.xlane.f32.xlu0 %v1898
        %v1900 = vpop.xlane.xlu0 %1899
        %v1901 = vsel %vm639, %v1855, -inf
        %1902 = vmax.xlane.f32.xlu0 %v1901
        %v1903 = vpop.xlane.xlu0 %1902
        %v1904 = vsel %vm639, %v1858, -inf
        %1905 = vmax.xlane.f32.xlu0 %v1904
        %v1906 = vpop.xlane.xlu0 %1905
        %v1907 = vsel %vm639, %v1860, -inf
        %1908 = vmax.xlane.f32.xlu0 %v1907
        %v1909 = vpop.xlane.xlu0 %1908
        %v1910 = vsub.f32 %v1774, %v1864
        %v1911 = vsub.f32 %v1776, %v1867
        %v1912 = vsub.f32 %v1779, %v1870
        %v1913 = vsub.f32 %v1781, %v1873
        %v1914 = vsub.f32 %v1784, %v1876
        %v1915 = vsub.f32 %v1786, %v1879
        %v1916 = vsub.f32 %v1789, %v1882
        %v1917 = vsub.f32 %v1791, %v1885
        %v1918 = vsub.f32 %v1843, %v1888
        %v1919 = vsub.f32 %v1845, %v1891
        %v1920 = vsub.f32 %v1848, %v1894
        %v1921 = vsub.f32 %v1850, %v1897
        %v1922 = vsub.f32 %v1853, %v1900
        %v1923 = vsub.f32 %v1855, %v1903
        %v1924 = vsub.f32 %v1858, %v1906
        %v1925 = vsub.f32 %v1860, %v1909
        %v1926 = vmul.f32 %v1910, 1.442695
        %v1927 = vpow.pop %v1926
        %v1928 = vmul.f32 %v1911, 1.442695
        %v1929 = vpow.pop %v1928
        %v1930 = vmul.f32 %v1912, 1.442695
        %v1931 = vpow.pop %v1930
        %v1932 = vmul.f32 %v1913, 1.442695
        %v1933 = vpow.pop %v1932
        %v1934 = vmul.f32 %v1914, 1.442695
        %v1935 = vpow.pop %v1934
        %v1936 = vmul.f32 %v1915, 1.442695
        %v1937 = vpow.pop %v1936
        %v1938 = vmul.f32 %v1916, 1.442695
        %v1939 = vpow.pop %v1938
        %v1940 = vmul.f32 %v1917, 1.442695
        %v1941 = vpow.pop %v1940
        %v1942 = vmul.f32 %v1918, 1.442695
        %v1943 = vpow.pop %v1942
        %v1944 = vmul.f32 %v1919, 1.442695
        %v1945 = vpow.pop %v1944
        %v1946 = vmul.f32 %v1920, 1.442695
        %v1947 = vpow.pop %v1946
        %v1948 = vmul.f32 %v1921, 1.442695
        %v1949 = vpow.pop %v1948
        %v1950 = vmul.f32 %v1922, 1.442695
        %v1951 = vpow.pop %v1950
        %v1952 = vmul.f32 %v1923, 1.442695
        %v1953 = vpow.pop %v1952
        %v1954 = vmul.f32 %v1924, 1.442695
        %v1955 = vpow.pop %v1954
        %v1956 = vmul.f32 %v1925, 1.442695
        %v1957 = vpow.pop %v1956
        %v1958 = vsel %vm639, %v1927, 0.0
        %1959 = vadd.xlane.f32.xlu0 %v1958
        %v1960 = vpop.xlane.xlu0 %1959
        %v1961 = vsel %vm639, %v1929, 0.0
        %1962 = vadd.xlane.f32.xlu0 %v1961
        %v1963 = vpop.xlane.xlu0 %1962
        %v1964 = vsel %vm639, %v1931, 0.0
        %1965 = vadd.xlane.f32.xlu0 %v1964
        %v1966 = vpop.xlane.xlu0 %1965
        %v1967 = vsel %vm639, %v1933, 0.0
        %1968 = vadd.xlane.f32.xlu0 %v1967
        %v1969 = vpop.xlane.xlu0 %1968
        %v1970 = vsel %vm639, %v1935, 0.0
        %1971 = vadd.xlane.f32.xlu0 %v1970
        %v1972 = vpop.xlane.xlu0 %1971
        %v1973 = vsel %vm639, %v1937, 0.0
        %1974 = vadd.xlane.f32.xlu0 %v1973
        %v1975 = vpop.xlane.xlu0 %1974
        %v1976 = vsel %vm639, %v1939, 0.0
        %1977 = vadd.xlane.f32.xlu0 %v1976
        %v1978 = vpop.xlane.xlu0 %1977
        %v1979 = vsel %vm639, %v1941, 0.0
        %1980 = vadd.xlane.f32.xlu0 %v1979
        %v1981 = vpop.xlane.xlu0 %1980
        %v1982 = vsel %vm639, %v1943, 0.0
        %1983 = vadd.xlane.f32.xlu0 %v1982
        %v1984 = vpop.xlane.xlu0 %1983
        %v1985 = vsel %vm639, %v1945, 0.0
        %1986 = vadd.xlane.f32.xlu0 %v1985
        %v1987 = vpop.xlane.xlu0 %1986
        %v1988 = vsel %vm639, %v1947, 0.0
        %1989 = vadd.xlane.f32.xlu0 %v1988
        %v1990 = vpop.xlane.xlu0 %1989
        %v1991 = vsel %vm639, %v1949, 0.0
        %1992 = vadd.xlane.f32.xlu0 %v1991
        %v1993 = vpop.xlane.xlu0 %1992
        %v1994 = vsel %vm639, %v1951, 0.0
        %1995 = vadd.xlane.f32.xlu0 %v1994
        %v1996 = vpop.xlane.xlu0 %1995
        %v1997 = vsel %vm639, %v1953, 0.0
        %1998 = vadd.xlane.f32.xlu0 %v1997
        %v1999 = vpop.xlane.xlu0 %1998
        %v2000 = vsel %vm639, %v1955, 0.0
        %2001 = vadd.xlane.f32.xlu0 %v2000
        %v2002 = vpop.xlane.xlu0 %2001
        %v2003 = vsel %vm639, %v1957, 0.0
        %2004 = vadd.xlane.f32.xlu0 %v2003
        %v2005 = vpop.xlane.xlu0 %2004
        %v2006 = vrcp.pop %v1960
        %v2007 = vrcp.pop %v1963
        %v2008 = vrcp.pop %v1966
        %v2009 = vrcp.pop %v1969
        %v2010 = vrcp.pop %v1972
        %v2011 = vrcp.pop %v1975
        %v2012 = vrcp.pop %v1978
        %v2013 = vrcp.pop %v1981
        %v2014 = vrcp.pop %v1984
        %v2015 = vrcp.pop %v1987
        %v2016 = vrcp.pop %v1990
        %v2017 = vrcp.pop %v1993
        %v2018 = vrcp.pop %v1996
        %v2019 = vrcp.pop %v1999
        %v2020 = vrcp.pop %v2002
        %v2021 = vrcp.pop %v2005
        %v2022 = vmul.f32 %v1927, %v2006
        %v2023 = vmul.f32 %v1929, %v2007
        %v2024 = vmul.f32 %v1931, %v2008
        %v2025 = vmul.f32 %v1933, %v2009
        %v2026 = vmul.f32 %v1935, %v2010
        %v2027 = vmul.f32 %v1937, %v2011
        %v2028 = vmul.f32 %v1939, %v2012
        %v2029 = vmul.f32 %v1941, %v2013
        %v2030 = vmul.f32 %v1943, %v2014
        %v2031 = vmul.f32 %v1945, %v2015
        %v2032 = vmul.f32 %v1947, %v2016
        %v2033 = vmul.f32 %v1949, %v2017
        %v2034 = vmul.f32 %v1951, %v2018
        %v2035 = vmul.f32 %v1953, %v2019
        %v2036 = vmul.f32 %v1955, %v2020
        %v2037 = vmul.f32 %v1957, %v2021
        %v2038 = vmax.f32 %v2022, 1e-08
        %v2039 = vmax.f32 %v2023, 1e-08
        %v2040 = vmax.f32 %v2024, 1e-08
        %v2041 = vmax.f32 %v2025, 1e-08
        %v2042 = vmax.f32 %v2026, 1e-08
        %v2043 = vmax.f32 %v2027, 1e-08
        %v2044 = vmax.f32 %v2028, 1e-08
        %v2045 = vmax.f32 %v2029, 1e-08
        %v2046 = vmax.f32 %v2030, 1e-08
        %v2047 = vmax.f32 %v2031, 1e-08
        %v2048 = vmax.f32 %v2032, 1e-08
        %v2049 = vmax.f32 %v2033, 1e-08
        %v2050 = vmax.f32 %v2034, 1e-08
        %v2051 = vmax.f32 %v2035, 1e-08
        %v2052 = vmax.f32 %v2036, 1e-08
        %v2053 = vmax.f32 %v2037, 1e-08
        %v2054 = vpack.c.bf16 %v2038, %v2038
        %v2055 = vpack.c.bf16 %v2039, %v2039
        %v2056 = vpack.c.bf16 %v2040, %v2040
        %v2057 = vpack.c.bf16 %v2041, %v2041
        %v2058 = vpack.c.bf16 %v2042, %v2042
        %v2059 = vpack.c.bf16 %v2043, %v2043
        %v2060 = vpack.c.bf16 %v2044, %v2044
        %v2061 = vpack.c.bf16 %v2045, %v2045
        %v2062 = vpack.c.bf16 %v2046, %v2046
        %v2063 = vpack.c.bf16 %v2047, %v2047
        %v2064 = vpack.c.bf16 %v2048, %v2048
        %v2065 = vpack.c.bf16 %v2049, %v2049
        %v2066 = vpack.c.bf16 %v2050, %v2050
        %v2067 = vpack.c.bf16 %v2051, %v2051
        %v2068 = vpack.c.bf16 %v2052, %v2052
        %v2069 = vpack.c.bf16 %v2053, %v2053
        %v2078 = vunpack.c.l.b16 %v2054
        %v2079 = vunpack.c.l.b16 %v2055
        %v2080 = vunpack.c.l.b16 %v2056
        %v2081 = vunpack.c.l.b16 %v2057
        %v2082 = vunpack.c.l.b16 %v2058
        %v2083 = vunpack.c.l.b16 %v2059
        %v2084 = vunpack.c.l.b16 %v2060
        %v2085 = vunpack.c.l.b16 %v2061
        %v2086 = vpack.c.b16 %v2079, %v2078
        %v2087 = vpack.c.b16 %v2081, %v2080
        %v2088 = vpack.c.b16 %v2083, %v2082
        %v2089 = vpack.c.b16 %v2085, %v2084
        %2090 = vrot.lane.b32.xlu0 %v492, 48
        %v2091 = vpop.permute.xlu0 %2090
        %2092 = vrot.lane.b32.xlu0 %v493, 48
        %v2093 = vpop.permute.xlu0 %2092
        %2094 = vrot.lane.b32.xlu0 %v494, 48
        %v2095 = vpop.permute.xlu0 %2094
        %2096 = vrot.lane.b32.xlu0 %v495, 48
        %v2097 = vpop.permute.xlu0 %2096
        %v2103 = vsel %vm639, %v2086, 0
        %v2106 = vsel %vm639, %v2087, 0
        %v2109 = vsel %vm639, %v2088, 0
        %v2112 = vsel %vm639, %v2089, 0
        %2114 = vmatpush.bf16.msra.mxu0 0
        %2115 = vmatpush.bf16.msra.mxu0 0
        %2116 = vmatpush.bf16.msra.mxu0 0
        %2117 = vmatpush.bf16.msra.mxu0 0
        %2118 = vmatpush.bf16.msra.mxu0 %v2097
        %2119 = vmatpush.bf16.msra.mxu0 %v2095
        %2120 = vmatpush.bf16.msra.mxu0 %v2093
        %2121 = vmatpush.bf16.msra.mxu0 %v2091
        %2122 = vmatmul.bf16.gmra.mxu0 %v2103
        %v2123 = vpop.f32.mrf.mxu0
        %v2124 = vadd.f32 0.0, %v2123
        %v2125 = vpop.f32.mrf.mxu0
        %v2126 = vadd.f32 0.0, %v2125
        %2127 = vmatmul.bf16.gmra.mxu0 %v2106
        %v2128 = vpop.f32.mrf.mxu0
        %v2129 = vadd.f32 0.0, %v2128
        %v2130 = vpop.f32.mrf.mxu0
        %v2131 = vadd.f32 0.0, %v2130
        %2132 = vmatmul.bf16.gmra.mxu0 %v2109
        %v2133 = vpop.f32.mrf.mxu0
        %v2134 = vadd.f32 0.0, %v2133
        %v2135 = vpop.f32.mrf.mxu0
        %v2136 = vadd.f32 0.0, %v2135
        %2137 = vmatmul.bf16.gmra.mxu0 %v2112
        %v2138 = vpop.f32.mrf.mxu0
        %v2139 = vadd.f32 0.0, %v2138
        %v2140 = vpop.f32.mrf.mxu0
        %v2141 = vadd.f32 0.0, %v2140
        %2142 = vdwg.mxu0
        %v2151 = vunpack.c.l.b16 %v2062
        %v2152 = vunpack.c.l.b16 %v2063
        %v2153 = vunpack.c.l.b16 %v2064
        %v2154 = vunpack.c.l.b16 %v2065
        %v2155 = vunpack.c.l.b16 %v2066
        %v2156 = vunpack.c.l.b16 %v2067
        %v2157 = vunpack.c.l.b16 %v2068
        %v2158 = vunpack.c.l.b16 %v2069
        %v2159 = vpack.c.b16 %v2152, %v2151
        %v2160 = vpack.c.b16 %v2154, %v2153
        %v2161 = vpack.c.b16 %v2156, %v2155
        %v2162 = vpack.c.b16 %v2158, %v2157
        %2163 = vrot.lane.b32.xlu0 %v574, 48
        %v2164 = vpop.permute.xlu0 %2163
        %2165 = vrot.lane.b32.xlu0 %v575, 48
        %v2166 = vpop.permute.xlu0 %2165
        %2167 = vrot.lane.b32.xlu0 %v576, 48
        %v2168 = vpop.permute.xlu0 %2167
        %2169 = vrot.lane.b32.xlu0 %v577, 48
        %v2170 = vpop.permute.xlu0 %2169
        %v2176 = vsel %vm639, %v2159, 0
        %v2179 = vsel %vm639, %v2160, 0
        %v2182 = vsel %vm639, %v2161, 0
        %v2185 = vsel %vm639, %v2162, 0
        %2187 = vmatpush.bf16.msra.mxu0 0
        %2188 = vmatpush.bf16.msra.mxu0 0
        %2189 = vmatpush.bf16.msra.mxu0 0
        %2190 = vmatpush.bf16.msra.mxu0 0
        %2191 = vmatpush.bf16.msra.mxu0 %v2170
        %2192 = vmatpush.bf16.msra.mxu0 %v2168
        %2193 = vmatpush.bf16.msra.mxu0 %v2166
        %2194 = vmatpush.bf16.msra.mxu0 %v2164
        %2195 = vmatmul.bf16.gmra.mxu0 %v2176
        %v2196 = vpop.f32.mrf.mxu0
        %v2197 = vadd.f32 0.0, %v2196
        %v2198 = vpop.f32.mrf.mxu0
        %v2199 = vadd.f32 0.0, %v2198
        %2200 = vmatmul.bf16.gmra.mxu0 %v2179
        %v2201 = vpop.f32.mrf.mxu0
        %v2202 = vadd.f32 0.0, %v2201
        %v2203 = vpop.f32.mrf.mxu0
        %v2204 = vadd.f32 0.0, %v2203
        %2205 = vmatmul.bf16.gmra.mxu0 %v2182
        %v2206 = vpop.f32.mrf.mxu0
        %v2207 = vadd.f32 0.0, %v2206
        %v2208 = vpop.f32.mrf.mxu0
        %v2209 = vadd.f32 0.0, %v2208
        %2210 = vmatmul.bf16.gmra.mxu0 %v2185
        %v2211 = vpop.f32.mrf.mxu0
        %v2212 = vadd.f32 0.0, %v2211
        %v2213 = vpop.f32.mrf.mxu0
        %v2214 = vadd.f32 0.0, %v2213
        %2215 = vdwg.mxu0
        %v2216 = vpack.c.bf16 %v2126, %v2124
        %v2217 = vpack.c.bf16 %v2131, %v2129
        %v2218 = vpack.c.bf16 %v2136, %v2134
        %v2219 = vpack.c.bf16 %v2141, %v2139
        %v2220 = vpack.c.bf16 %v2199, %v2197
        %v2221 = vpack.c.bf16 %v2204, %v2202
        %v2222 = vpack.c.bf16 %v2209, %v2207
        %v2223 = vpack.c.bf16 %v2214, %v2212
        %s2224 = scalar_lea.vmem %s3, 8
        %v2225 = vld [vmem:[%s2224] sm:$0xf]
        %v2227 = vsel %vm504, %v2216, 0
        %v2230 = vsel %vm504, %v2217, 0
        %v2233 = vsel %vm504, %v2218, 0
        %v2236 = vsel %vm504, %v2219, 0
        %v2239 = vsel %vm504, %v2220, 0
        %v2242 = vsel %vm504, %v2221, 0
        %v2245 = vsel %vm504, %v2222, 0
        %v2248 = vsel %vm504, %v2223, 0
        %v2251 = vsel %vm1562, %v2225, 0
        %2253 = vmatpush.bf16.msra.mxu0 0
        %2254 = vmatpush.bf16.msra.mxu0 0
        %2255 = vmatpush.bf16.msra.mxu0 0
        %2256 = vmatpush.bf16.msra.mxu0 0
        %2257 = vmatpush.bf16.msra.mxu0 0
        %2258 = vmatpush.bf16.msra.mxu0 0
        %2259 = vmatpush.bf16.msra.mxu0 0
        %2260 = vmatpush.bf16.msra.mxu0 %v2251
        %2261 = vmatmul.bf16.gmra.mxu0 %v2227
        %v2262 = vpop.f32.mrf.mxu0
        %v2263 = vadd.f32 0.0, %v2262
        %v2264 = vpop.f32.mrf.mxu0
        %v2265 = vadd.f32 0.0, %v2264
        %2266 = vmatmul.bf16.gmra.mxu0 %v2230
        %v2267 = vpop.f32.mrf.mxu0
        %v2268 = vadd.f32 0.0, %v2267
        %v2269 = vpop.f32.mrf.mxu0
        %v2270 = vadd.f32 0.0, %v2269
        %2271 = vmatmul.bf16.gmra.mxu0 %v2233
        %v2272 = vpop.f32.mrf.mxu0
        %v2273 = vadd.f32 0.0, %v2272
        %v2274 = vpop.f32.mrf.mxu0
        %v2275 = vadd.f32 0.0, %v2274
        %2276 = vmatmul.bf16.gmra.mxu0 %v2236
        %v2277 = vpop.f32.mrf.mxu0
        %v2278 = vadd.f32 0.0, %v2277
        %v2279 = vpop.f32.mrf.mxu0
        %v2280 = vadd.f32 0.0, %v2279
        %2281 = vmatmul.bf16.gmra.mxu0 %v2239
        %v2282 = vpop.f32.mrf.mxu0
        %v2283 = vadd.f32 0.0, %v2282
        %v2284 = vpop.f32.mrf.mxu0
        %v2285 = vadd.f32 0.0, %v2284
        %2286 = vmatmul.bf16.gmra.mxu0 %v2242
        %v2287 = vpop.f32.mrf.mxu0
        %v2288 = vadd.f32 0.0, %v2287
        %v2289 = vpop.f32.mrf.mxu0
        %v2290 = vadd.f32 0.0, %v2289
        %2291 = vmatmul.bf16.gmra.mxu0 %v2245
        %v2292 = vpop.f32.mrf.mxu0
        %v2293 = vadd.f32 0.0, %v2292
        %v2294 = vpop.f32.mrf.mxu0
        %v2295 = vadd.f32 0.0, %v2294
        %2296 = vmatmul.bf16.gmra.mxu0 %v2248
        %v2297 = vpop.f32.mrf.mxu0
        %v2298 = vadd.f32 0.0, %v2297
        %v2299 = vpop.f32.mrf.mxu0
        %v2300 = vadd.f32 0.0, %v2299
        %2301 = vdwg.mxu0
        %v2302 = vadd.f32 %v1652, %v2263
        %v2303 = vadd.f32 %v1654, %v2265
        %v2304 = vadd.f32 %v1657, %v2268
        %v2305 = vadd.f32 %v1659, %v2270
        %v2306 = vadd.f32 %v1662, %v2273
        %v2307 = vadd.f32 %v1664, %v2275
        %v2308 = vadd.f32 %v1667, %v2278
        %v2309 = vadd.f32 %v1669, %v2280
        %v2310 = vadd.f32 %v1672, %v2283
        %v2311 = vadd.f32 %v1674, %v2285
        %v2312 = vadd.f32 %v1677, %v2288
        %v2313 = vadd.f32 %v1679, %v2290
        %v2314 = vadd.f32 %v1682, %v2293
        %v2315 = vadd.f32 %v1684, %v2295
        %v2316 = vadd.f32 %v1687, %v2298
        %v2317 = vadd.f32 %v1689, %v2300
        %s2318 = scalar_lea.vmem [#allocation2], 192
        %v2319 = vld [vmem:[%s2318] sm:$0xf]
        %v2320 = vld [vmem:[%s2318 + $0x4] sm:$0xf]
        %v2321 = vld [vmem:[%s2318 + $0x8] sm:$0xf]
        %v2322 = vld [vmem:[%s2318 + $0xc] sm:$0xf]
        %v2323 = vld [vmem:[%s2318 + $0x10] sm:$0xf]
        %v2324 = vld [vmem:[%s2318 + $0x14] sm:$0xf]
        %v2325 = vld [vmem:[%s2318 + $0x18] sm:$0xf]
        %v2326 = vld [vmem:[%s2318 + $0x1c] sm:$0xf]
        %v2327 = vld [vmem:[%s2318 + $0x20] sm:$0xf]
        %v2328 = vld [vmem:[%s2318 + $0x24] sm:$0xf]
        %v2329 = vld [vmem:[%s2318 + $0x28] sm:$0xf]
        %v2330 = vld [vmem:[%s2318 + $0x2c] sm:$0xf]
        %v2331 = vld [vmem:[%s2318 + $0x30] sm:$0xf]
        %v2332 = vld [vmem:[%s2318 + $0x34] sm:$0xf]
        %v2333 = vld [vmem:[%s2318 + $0x38] sm:$0xf]
        %v2334 = vld [vmem:[%s2318 + $0x3c] sm:$0xf]
        %v2335 = vunpack.c.l.bf16 %v2319
        %v2336 = vunpack.c.l.bf16 %v2320
        %v2337 = vunpack.c.l.bf16 %v2321
        %v2338 = vunpack.c.l.bf16 %v2322
        %v2339 = vunpack.c.l.bf16 %v2323
        %v2340 = vunpack.c.l.bf16 %v2324
        %v2341 = vunpack.c.l.bf16 %v2325
        %v2342 = vunpack.c.l.bf16 %v2326
        %v2343 = vunpack.c.l.bf16 %v2327
        %v2344 = vunpack.c.l.bf16 %v2328
        %v2345 = vunpack.c.l.bf16 %v2329
        %v2346 = vunpack.c.l.bf16 %v2330
        %v2347 = vunpack.c.l.bf16 %v2331
        %v2348 = vunpack.c.l.bf16 %v2332
        %v2349 = vunpack.c.l.bf16 %v2333
        %v2350 = vunpack.c.l.bf16 %v2334
        %2351 = vrot.lane.b32.xlu0 %v492, 104
        %v2352 = vpop.permute.xlu0 %2351
        %2353 = vrot.lane.b32.xlu0 %v493, 104
        %v2354 = vpop.permute.xlu0 %2353
        %2355 = vrot.lane.b32.xlu0 %v494, 104
        %v2356 = vpop.permute.xlu0 %2355
        %2357 = vrot.lane.b32.xlu0 %v495, 104
        %v2358 = vpop.permute.xlu0 %2357
        %2359 = vrot.lane.b32.xlu0 %v492, 72
        %v2360 = vpop.permute.xlu0 %2359
        %2361 = vrot.lane.b32.xlu0 %v493, 72
        %v2362 = vpop.permute.xlu0 %2361
        %2363 = vrot.lane.b32.xlu0 %v494, 72
        %v2364 = vpop.permute.xlu0 %2363
        %2365 = vrot.lane.b32.xlu0 %v495, 72
        %v2366 = vpop.permute.xlu0 %2365
        %v2368 = vsel %vm504, %v2352, 0
        %v2371 = vsel %vm504, %v2354, 0
        %v2374 = vsel %vm504, %v2356, 0
        %v2377 = vsel %vm504, %v2358, 0
        %v2380 = vsel %vm504, %v2360, 0
        %v2383 = vsel %vm504, %v2362, 0
        %v2386 = vsel %vm504, %v2364, 0
        %v2389 = vsel %vm504, %v2366, 0
        %2391 = vmatpush.bf16.xpose.msra.mxu0 0
        %2392 = vmatpush.bf16.xpose.msra.mxu0 0
        %2393 = vmatpush.bf16.xpose.msra.mxu0 0
        %2394 = vmatpush.bf16.xpose.msra.mxu0 0
        %2395 = vmatpush.bf16.xpose.msra.mxu0 %v2389
        %2396 = vmatpush.bf16.xpose.msra.mxu0 %v2386
        %2397 = vmatpush.bf16.xpose.msra.mxu0 %v2383
        %2398 = vmatpush.bf16.xpose.msra.mxu0 %v2380
        %2399 = vmatmul.bf16.gmra.mxu0 %v2368
        %v2400 = vpop.f32.mrf.mxu0
        %v2401 = vadd.f32 %v2335, %v2400
        %v2402 = vpop.f32.mrf.mxu0
        %v2403 = vadd.f32 %v2336, %v2402
        %2404 = vmatmul.bf16.gmra.mxu0 %v2371
        %v2405 = vpop.f32.mrf.mxu0
        %v2406 = vadd.f32 %v2337, %v2405
        %v2407 = vpop.f32.mrf.mxu0
        %v2408 = vadd.f32 %v2338, %v2407
        %2409 = vmatmul.bf16.gmra.mxu0 %v2374
        %v2410 = vpop.f32.mrf.mxu0
        %v2411 = vadd.f32 %v2339, %v2410
        %v2412 = vpop.f32.mrf.mxu0
        %v2413 = vadd.f32 %v2340, %v2412
        %2414 = vmatmul.bf16.gmra.mxu0 %v2377
        %v2415 = vpop.f32.mrf.mxu0
        %v2416 = vadd.f32 %v2341, %v2415
        %v2417 = vpop.f32.mrf.mxu0
        %v2418 = vadd.f32 %v2342, %v2417
        %2419 = vdwg.mxu0
        %2420 = vrot.lane.b32.xlu0 %v574, 104
        %v2421 = vpop.permute.xlu0 %2420
        %2422 = vrot.lane.b32.xlu0 %v575, 104
        %v2423 = vpop.permute.xlu0 %2422
        %2424 = vrot.lane.b32.xlu0 %v576, 104
        %v2425 = vpop.permute.xlu0 %2424
        %2426 = vrot.lane.b32.xlu0 %v577, 104
        %v2427 = vpop.permute.xlu0 %2426
        %2428 = vrot.lane.b32.xlu0 %v574, 72
        %v2429 = vpop.permute.xlu0 %2428
        %2430 = vrot.lane.b32.xlu0 %v575, 72
        %v2431 = vpop.permute.xlu0 %2430
        %2432 = vrot.lane.b32.xlu0 %v576, 72
        %v2433 = vpop.permute.xlu0 %2432
        %2434 = vrot.lane.b32.xlu0 %v577, 72
        %v2435 = vpop.permute.xlu0 %2434
        %v2437 = vsel %vm504, %v2421, 0
        %v2440 = vsel %vm504, %v2423, 0
        %v2443 = vsel %vm504, %v2425, 0
        %v2446 = vsel %vm504, %v2427, 0
        %v2449 = vsel %vm504, %v2429, 0
        %v2452 = vsel %vm504, %v2431, 0
        %v2455 = vsel %vm504, %v2433, 0
        %v2458 = vsel %vm504, %v2435, 0
        %2460 = vmatpush.bf16.xpose.msra.mxu0 0
        %2461 = vmatpush.bf16.xpose.msra.mxu0 0
        %2462 = vmatpush.bf16.xpose.msra.mxu0 0
        %2463 = vmatpush.bf16.xpose.msra.mxu0 0
        %2464 = vmatpush.bf16.xpose.msra.mxu0 %v2458
        %2465 = vmatpush.bf16.xpose.msra.mxu0 %v2455
        %2466 = vmatpush.bf16.xpose.msra.mxu0 %v2452
        %2467 = vmatpush.bf16.xpose.msra.mxu0 %v2449
        %2468 = vmatmul.bf16.gmra.mxu0 %v2437
        %v2469 = vpop.f32.mrf.mxu0
        %v2470 = vadd.f32 %v2343, %v2469
        %v2471 = vpop.f32.mrf.mxu0
        %v2472 = vadd.f32 %v2344, %v2471
        %2473 = vmatmul.bf16.gmra.mxu0 %v2440
        %v2474 = vpop.f32.mrf.mxu0
        %v2475 = vadd.f32 %v2345, %v2474
        %v2476 = vpop.f32.mrf.mxu0
        %v2477 = vadd.f32 %v2346, %v2476
        %2478 = vmatmul.bf16.gmra.mxu0 %v2443
        %v2479 = vpop.f32.mrf.mxu0
        %v2480 = vadd.f32 %v2347, %v2479
        %v2481 = vpop.f32.mrf.mxu0
        %v2482 = vadd.f32 %v2348, %v2481
        %2483 = vmatmul.bf16.gmra.mxu0 %v2446
        %v2484 = vpop.f32.mrf.mxu0
        %v2485 = vadd.f32 %v2349, %v2484
        %v2486 = vpop.f32.mrf.mxu0
        %v2487 = vadd.f32 %v2350, %v2486
        %2488 = vdwg.mxu0
        %v2489 = vsel %vm639, %v2401, -inf
        %2490 = vmax.xlane.f32.xlu0 %v2489
        %v2491 = vpop.xlane.xlu0 %2490
        %v2492 = vsel %vm639, %v2403, -inf
        %2493 = vmax.xlane.f32.xlu0 %v2492
        %v2494 = vpop.xlane.xlu0 %2493
        %v2495 = vsel %vm639, %v2406, -inf
        %2496 = vmax.xlane.f32.xlu0 %v2495
        %v2497 = vpop.xlane.xlu0 %2496
        %v2498 = vsel %vm639, %v2408, -inf
        %2499 = vmax.xlane.f32.xlu0 %v2498
        %v2500 = vpop.xlane.xlu0 %2499
        %v2501 = vsel %vm639, %v2411, -inf
        %2502 = vmax.xlane.f32.xlu0 %v2501
        %v2503 = vpop.xlane.xlu0 %2502
        %v2504 = vsel %vm639, %v2413, -inf
        %2505 = vmax.xlane.f32.xlu0 %v2504
        %v2506 = vpop.xlane.xlu0 %2505
        %v2507 = vsel %vm639, %v2416, -inf
        %2508 = vmax.xlane.f32.xlu0 %v2507
        %v2509 = vpop.xlane.xlu0 %2508
        %v2510 = vsel %vm639, %v2418, -inf
        %2511 = vmax.xlane.f32.xlu0 %v2510
        %v2512 = vpop.xlane.xlu0 %2511
        %v2513 = vsel %vm639, %v2470, -inf
        %2514 = vmax.xlane.f32.xlu0 %v2513
        %v2515 = vpop.xlane.xlu0 %2514
        %v2516 = vsel %vm639, %v2472, -inf
        %2517 = vmax.xlane.f32.xlu0 %v2516
        %v2518 = vpop.xlane.xlu0 %2517
        %v2519 = vsel %vm639, %v2475, -inf
        %2520 = vmax.xlane.f32.xlu0 %v2519
        %v2521 = vpop.xlane.xlu0 %2520
        %v2522 = vsel %vm639, %v2477, -inf
        %2523 = vmax.xlane.f32.xlu0 %v2522
        %v2524 = vpop.xlane.xlu0 %2523
        %v2525 = vsel %vm639, %v2480, -inf
        %2526 = vmax.xlane.f32.xlu0 %v2525
        %v2527 = vpop.xlane.xlu0 %2526
        %v2528 = vsel %vm639, %v2482, -inf
        %2529 = vmax.xlane.f32.xlu0 %v2528
        %v2530 = vpop.xlane.xlu0 %2529
        %v2531 = vsel %vm639, %v2485, -inf
        %2532 = vmax.xlane.f32.xlu0 %v2531
        %v2533 = vpop.xlane.xlu0 %2532
        %v2534 = vsel %vm639, %v2487, -inf
        %2535 = vmax.xlane.f32.xlu0 %v2534
        %v2536 = vpop.xlane.xlu0 %2535
        %v2537 = vsub.f32 %v2401, %v2491
        %v2538 = vsub.f32 %v2403, %v2494
        %v2539 = vsub.f32 %v2406, %v2497
        %v2540 = vsub.f32 %v2408, %v2500
        %v2541 = vsub.f32 %v2411, %v2503
        %v2542 = vsub.f32 %v2413, %v2506
        %v2543 = vsub.f32 %v2416, %v2509
        %v2544 = vsub.f32 %v2418, %v2512
        %v2545 = vsub.f32 %v2470, %v2515
        %v2546 = vsub.f32 %v2472, %v2518
        %v2547 = vsub.f32 %v2475, %v2521
        %v2548 = vsub.f32 %v2477, %v2524
        %v2549 = vsub.f32 %v2480, %v2527
        %v2550 = vsub.f32 %v2482, %v2530
        %v2551 = vsub.f32 %v2485, %v2533
        %v2552 = vsub.f32 %v2487, %v2536
        %v2553 = vmul.f32 %v2537, 1.442695
        %v2554 = vpow.pop %v2553
        %v2555 = vmul.f32 %v2538, 1.442695
        %v2556 = vpow.pop %v2555
        %v2557 = vmul.f32 %v2539, 1.442695
        %v2558 = vpow.pop %v2557
        %v2559 = vmul.f32 %v2540, 1.442695
        %v2560 = vpow.pop %v2559
        %v2561 = vmul.f32 %v2541, 1.442695
        %v2562 = vpow.pop %v2561
        %v2563 = vmul.f32 %v2542, 1.442695
        %v2564 = vpow.pop %v2563
        %v2565 = vmul.f32 %v2543, 1.442695
        %v2566 = vpow.pop %v2565
        %v2567 = vmul.f32 %v2544, 1.442695
        %v2568 = vpow.pop %v2567
        %v2569 = vmul.f32 %v2545, 1.442695
        %v2570 = vpow.pop %v2569
        %v2571 = vmul.f32 %v2546, 1.442695
        %v2572 = vpow.pop %v2571
        %v2573 = vmul.f32 %v2547, 1.442695
        %v2574 = vpow.pop %v2573
        %v2575 = vmul.f32 %v2548, 1.442695
        %v2576 = vpow.pop %v2575
        %v2577 = vmul.f32 %v2549, 1.442695
        %v2578 = vpow.pop %v2577
        %v2579 = vmul.f32 %v2550, 1.442695
        %v2580 = vpow.pop %v2579
        %v2581 = vmul.f32 %v2551, 1.442695
        %v2582 = vpow.pop %v2581
        %v2583 = vmul.f32 %v2552, 1.442695
        %v2584 = vpow.pop %v2583
        %v2585 = vsel %vm639, %v2554, 0.0
        %2586 = vadd.xlane.f32.xlu0 %v2585
        %v2587 = vpop.xlane.xlu0 %2586
        %v2588 = vsel %vm639, %v2556, 0.0
        %2589 = vadd.xlane.f32.xlu0 %v2588
        %v2590 = vpop.xlane.xlu0 %2589
        %v2591 = vsel %vm639, %v2558, 0.0
        %2592 = vadd.xlane.f32.xlu0 %v2591
        %v2593 = vpop.xlane.xlu0 %2592
        %v2594 = vsel %vm639, %v2560, 0.0
        %2595 = vadd.xlane.f32.xlu0 %v2594
        %v2596 = vpop.xlane.xlu0 %2595
        %v2597 = vsel %vm639, %v2562, 0.0
        %2598 = vadd.xlane.f32.xlu0 %v2597
        %v2599 = vpop.xlane.xlu0 %2598
        %v2600 = vsel %vm639, %v2564, 0.0
        %2601 = vadd.xlane.f32.xlu0 %v2600
        %v2602 = vpop.xlane.xlu0 %2601
        %v2603 = vsel %vm639, %v2566, 0.0
        %2604 = vadd.xlane.f32.xlu0 %v2603
        %v2605 = vpop.xlane.xlu0 %2604
        %v2606 = vsel %vm639, %v2568, 0.0
        %2607 = vadd.xlane.f32.xlu0 %v2606
        %v2608 = vpop.xlane.xlu0 %2607
        %v2609 = vsel %vm639, %v2570, 0.0
        %2610 = vadd.xlane.f32.xlu0 %v2609
        %v2611 = vpop.xlane.xlu0 %2610
        %v2612 = vsel %vm639, %v2572, 0.0
        %2613 = vadd.xlane.f32.xlu0 %v2612
        %v2614 = vpop.xlane.xlu0 %2613
        %v2615 = vsel %vm639, %v2574, 0.0
        %2616 = vadd.xlane.f32.xlu0 %v2615
        %v2617 = vpop.xlane.xlu0 %2616
        %v2618 = vsel %vm639, %v2576, 0.0
        %2619 = vadd.xlane.f32.xlu0 %v2618
        %v2620 = vpop.xlane.xlu0 %2619
        %v2621 = vsel %vm639, %v2578, 0.0
        %2622 = vadd.xlane.f32.xlu0 %v2621
        %v2623 = vpop.xlane.xlu0 %2622
        %v2624 = vsel %vm639, %v2580, 0.0
        %2625 = vadd.xlane.f32.xlu0 %v2624
        %v2626 = vpop.xlane.xlu0 %2625
        %v2627 = vsel %vm639, %v2582, 0.0
        %2628 = vadd.xlane.f32.xlu0 %v2627
        %v2629 = vpop.xlane.xlu0 %2628
        %v2630 = vsel %vm639, %v2584, 0.0
        %2631 = vadd.xlane.f32.xlu0 %v2630
        %v2632 = vpop.xlane.xlu0 %2631
        %v2633 = vrcp.pop %v2587
        %v2634 = vrcp.pop %v2590
        %v2635 = vrcp.pop %v2593
        %v2636 = vrcp.pop %v2596
        %v2637 = vrcp.pop %v2599
        %v2638 = vrcp.pop %v2602
        %v2639 = vrcp.pop %v2605
        %v2640 = vrcp.pop %v2608
        %v2641 = vrcp.pop %v2611
        %v2642 = vrcp.pop %v2614
        %v2643 = vrcp.pop %v2617
        %v2644 = vrcp.pop %v2620
        %v2645 = vrcp.pop %v2623
        %v2646 = vrcp.pop %v2626
        %v2647 = vrcp.pop %v2629
        %v2648 = vrcp.pop %v2632
        %v2649 = vmul.f32 %v2554, %v2633
        %v2650 = vmul.f32 %v2556, %v2634
        %v2651 = vmul.f32 %v2558, %v2635
        %v2652 = vmul.f32 %v2560, %v2636
        %v2653 = vmul.f32 %v2562, %v2637
        %v2654 = vmul.f32 %v2564, %v2638
        %v2655 = vmul.f32 %v2566, %v2639
        %v2656 = vmul.f32 %v2568, %v2640
        %v2657 = vmul.f32 %v2570, %v2641
        %v2658 = vmul.f32 %v2572, %v2642
        %v2659 = vmul.f32 %v2574, %v2643
        %v2660 = vmul.f32 %v2576, %v2644
        %v2661 = vmul.f32 %v2578, %v2645
        %v2662 = vmul.f32 %v2580, %v2646
        %v2663 = vmul.f32 %v2582, %v2647
        %v2664 = vmul.f32 %v2584, %v2648
        %v2665 = vmax.f32 %v2649, 1e-08
        %v2666 = vmax.f32 %v2650, 1e-08
        %v2667 = vmax.f32 %v2651, 1e-08
        %v2668 = vmax.f32 %v2652, 1e-08
        %v2669 = vmax.f32 %v2653, 1e-08
        %v2670 = vmax.f32 %v2654, 1e-08
        %v2671 = vmax.f32 %v2655, 1e-08
        %v2672 = vmax.f32 %v2656, 1e-08
        %v2673 = vmax.f32 %v2657, 1e-08
        %v2674 = vmax.f32 %v2658, 1e-08
        %v2675 = vmax.f32 %v2659, 1e-08
        %v2676 = vmax.f32 %v2660, 1e-08
        %v2677 = vmax.f32 %v2661, 1e-08
        %v2678 = vmax.f32 %v2662, 1e-08
        %v2679 = vmax.f32 %v2663, 1e-08
        %v2680 = vmax.f32 %v2664, 1e-08
        %v2681 = vpack.c.bf16 %v2665, %v2665
        %v2682 = vpack.c.bf16 %v2666, %v2666
        %v2683 = vpack.c.bf16 %v2667, %v2667
        %v2684 = vpack.c.bf16 %v2668, %v2668
        %v2685 = vpack.c.bf16 %v2669, %v2669
        %v2686 = vpack.c.bf16 %v2670, %v2670
        %v2687 = vpack.c.bf16 %v2671, %v2671
        %v2688 = vpack.c.bf16 %v2672, %v2672
        %v2689 = vpack.c.bf16 %v2673, %v2673
        %v2690 = vpack.c.bf16 %v2674, %v2674
        %v2691 = vpack.c.bf16 %v2675, %v2675
        %v2692 = vpack.c.bf16 %v2676, %v2676
        %v2693 = vpack.c.bf16 %v2677, %v2677
        %v2694 = vpack.c.bf16 %v2678, %v2678
        %v2695 = vpack.c.bf16 %v2679, %v2679
        %v2696 = vpack.c.bf16 %v2680, %v2680
        %v2705 = vunpack.c.l.b16 %v2681
        %v2706 = vunpack.c.l.b16 %v2682
        %v2707 = vunpack.c.l.b16 %v2683
        %v2708 = vunpack.c.l.b16 %v2684
        %v2709 = vunpack.c.l.b16 %v2685
        %v2710 = vunpack.c.l.b16 %v2686
        %v2711 = vunpack.c.l.b16 %v2687
        %v2712 = vunpack.c.l.b16 %v2688
        %v2713 = vpack.c.b16 %v2706, %v2705
        %v2714 = vpack.c.b16 %v2708, %v2707
        %v2715 = vpack.c.b16 %v2710, %v2709
        %v2716 = vpack.c.b16 %v2712, %v2711
        %2717 = vrot.lane.b32.xlu0 %v492, 40
        %v2718 = vpop.permute.xlu0 %2717
        %2719 = vrot.lane.b32.xlu0 %v493, 40
        %v2720 = vpop.permute.xlu0 %2719
        %2721 = vrot.lane.b32.xlu0 %v494, 40
        %v2722 = vpop.permute.xlu0 %2721
        %2723 = vrot.lane.b32.xlu0 %v495, 40
        %v2724 = vpop.permute.xlu0 %2723
        %v2730 = vsel %vm639, %v2713, 0
        %v2733 = vsel %vm639, %v2714, 0
        %v2736 = vsel %vm639, %v2715, 0
        %v2739 = vsel %vm639, %v2716, 0
        %2741 = vmatpush.bf16.msra.mxu0 0
        %2742 = vmatpush.bf16.msra.mxu0 0
        %2743 = vmatpush.bf16.msra.mxu0 0
        %2744 = vmatpush.bf16.msra.mxu0 0
        %2745 = vmatpush.bf16.msra.mxu0 %v2724
        %2746 = vmatpush.bf16.msra.mxu0 %v2722
        %2747 = vmatpush.bf16.msra.mxu0 %v2720
        %2748 = vmatpush.bf16.msra.mxu0 %v2718
        %2749 = vmatmul.bf16.gmra.mxu0 %v2730
        %v2750 = vpop.f32.mrf.mxu0
        %v2751 = vadd.f32 0.0, %v2750
        %v2752 = vpop.f32.mrf.mxu0
        %v2753 = vadd.f32 0.0, %v2752
        %2754 = vmatmul.bf16.gmra.mxu0 %v2733
        %v2755 = vpop.f32.mrf.mxu0
        %v2756 = vadd.f32 0.0, %v2755
        %v2757 = vpop.f32.mrf.mxu0
        %v2758 = vadd.f32 0.0, %v2757
        %2759 = vmatmul.bf16.gmra.mxu0 %v2736
        %v2760 = vpop.f32.mrf.mxu0
        %v2761 = vadd.f32 0.0, %v2760
        %v2762 = vpop.f32.mrf.mxu0
        %v2763 = vadd.f32 0.0, %v2762
        %2764 = vmatmul.bf16.gmra.mxu0 %v2739
        %v2765 = vpop.f32.mrf.mxu0
        %v2766 = vadd.f32 0.0, %v2765
        %v2767 = vpop.f32.mrf.mxu0
        %v2768 = vadd.f32 0.0, %v2767
        %2769 = vdwg.mxu0
        %v2778 = vunpack.c.l.b16 %v2689
        %v2779 = vunpack.c.l.b16 %v2690
        %v2780 = vunpack.c.l.b16 %v2691
        %v2781 = vunpack.c.l.b16 %v2692
        %v2782 = vunpack.c.l.b16 %v2693
        %v2783 = vunpack.c.l.b16 %v2694
        %v2784 = vunpack.c.l.b16 %v2695
        %v2785 = vunpack.c.l.b16 %v2696
        %v2786 = vpack.c.b16 %v2779, %v2778
        %v2787 = vpack.c.b16 %v2781, %v2780
        %v2788 = vpack.c.b16 %v2783, %v2782
        %v2789 = vpack.c.b16 %v2785, %v2784
        %2790 = vrot.lane.b32.xlu0 %v574, 40
        %v2791 = vpop.permute.xlu0 %2790
        %2792 = vrot.lane.b32.xlu0 %v575, 40
        %v2793 = vpop.permute.xlu0 %2792
        %2794 = vrot.lane.b32.xlu0 %v576, 40
        %v2795 = vpop.permute.xlu0 %2794
        %2796 = vrot.lane.b32.xlu0 %v577, 40
        %v2797 = vpop.permute.xlu0 %2796
        %v2803 = vsel %vm639, %v2786, 0
        %v2806 = vsel %vm639, %v2787, 0
        %v2809 = vsel %vm639, %v2788, 0
        %v2812 = vsel %vm639, %v2789, 0
        %2814 = vmatpush.bf16.msra.mxu0 0
        %2815 = vmatpush.bf16.msra.mxu0 0
        %2816 = vmatpush.bf16.msra.mxu0 0
        %2817 = vmatpush.bf16.msra.mxu0 0
        %2818 = vmatpush.bf16.msra.mxu0 %v2797
        %2819 = vmatpush.bf16.msra.mxu0 %v2795
        %2820 = vmatpush.bf16.msra.mxu0 %v2793
        %2821 = vmatpush.bf16.msra.mxu0 %v2791
        %2822 = vmatmul.bf16.gmra.mxu0 %v2803
        %v2823 = vpop.f32.mrf.mxu0
        %v2824 = vadd.f32 0.0, %v2823
        %v2825 = vpop.f32.mrf.mxu0
        %v2826 = vadd.f32 0.0, %v2825
        %2827 = vmatmul.bf16.gmra.mxu0 %v2806
        %v2828 = vpop.f32.mrf.mxu0
        %v2829 = vadd.f32 0.0, %v2828
        %v2830 = vpop.f32.mrf.mxu0
        %v2831 = vadd.f32 0.0, %v2830
        %2832 = vmatmul.bf16.gmra.mxu0 %v2809
        %v2833 = vpop.f32.mrf.mxu0
        %v2834 = vadd.f32 0.0, %v2833
        %v2835 = vpop.f32.mrf.mxu0
        %v2836 = vadd.f32 0.0, %v2835
        %2837 = vmatmul.bf16.gmra.mxu0 %v2812
        %v2838 = vpop.f32.mrf.mxu0
        %v2839 = vadd.f32 0.0, %v2838
        %v2840 = vpop.f32.mrf.mxu0
        %v2841 = vadd.f32 0.0, %v2840
        %2842 = vdwg.mxu0
        %v2843 = vpack.c.bf16 %v2753, %v2751
        %v2844 = vpack.c.bf16 %v2758, %v2756
        %v2845 = vpack.c.bf16 %v2763, %v2761
        %v2846 = vpack.c.bf16 %v2768, %v2766
        %v2847 = vpack.c.bf16 %v2826, %v2824
        %v2848 = vpack.c.bf16 %v2831, %v2829
        %v2849 = vpack.c.bf16 %v2836, %v2834
        %v2850 = vpack.c.bf16 %v2841, %v2839
        %s2851 = scalar_lea.vmem %s3, 12
        %v2852 = vld [vmem:[%s2851] sm:$0xf]
        %v2854 = vsel %vm504, %v2843, 0
        %v2857 = vsel %vm504, %v2844, 0
        %v2860 = vsel %vm504, %v2845, 0
        %v2863 = vsel %vm504, %v2846, 0
        %v2866 = vsel %vm504, %v2847, 0
        %v2869 = vsel %vm504, %v2848, 0
        %v2872 = vsel %vm504, %v2849, 0
        %v2875 = vsel %vm504, %v2850, 0
        %v2878 = vsel %vm1562, %v2852, 0
        %2880 = vmatpush.bf16.msra.mxu0 0
        %2881 = vmatpush.bf16.msra.mxu0 0
        %2882 = vmatpush.bf16.msra.mxu0 0
        %2883 = vmatpush.bf16.msra.mxu0 0
        %2884 = vmatpush.bf16.msra.mxu0 0
        %2885 = vmatpush.bf16.msra.mxu0 0
        %2886 = vmatpush.bf16.msra.mxu0 0
        %2887 = vmatpush.bf16.msra.mxu0 %v2878
        %2888 = vmatmul.bf16.gmra.mxu0 %v2854
        %v2889 = vpop.f32.mrf.mxu0
        %v2890 = vadd.f32 0.0, %v2889
        %v2891 = vpop.f32.mrf.mxu0
        %v2892 = vadd.f32 0.0, %v2891
        %2893 = vmatmul.bf16.gmra.mxu0 %v2857
        %v2894 = vpop.f32.mrf.mxu0
        %v2895 = vadd.f32 0.0, %v2894
        %v2896 = vpop.f32.mrf.mxu0
        %v2897 = vadd.f32 0.0, %v2896
        %2898 = vmatmul.bf16.gmra.mxu0 %v2860
        %v2899 = vpop.f32.mrf.mxu0
        %v2900 = vadd.f32 0.0, %v2899
        %v2901 = vpop.f32.mrf.mxu0
        %v2902 = vadd.f32 0.0, %v2901
        %2903 = vmatmul.bf16.gmra.mxu0 %v2863
        %v2904 = vpop.f32.mrf.mxu0
        %v2905 = vadd.f32 0.0, %v2904
        %v2906 = vpop.f32.mrf.mxu0
        %v2907 = vadd.f32 0.0, %v2906
        %2908 = vmatmul.bf16.gmra.mxu0 %v2866
        %v2909 = vpop.f32.mrf.mxu0
        %v2910 = vadd.f32 0.0, %v2909
        %v2911 = vpop.f32.mrf.mxu0
        %v2912 = vadd.f32 0.0, %v2911
        %2913 = vmatmul.bf16.gmra.mxu0 %v2869
        %v2914 = vpop.f32.mrf.mxu0
        %v2915 = vadd.f32 0.0, %v2914
        %v2916 = vpop.f32.mrf.mxu0
        %v2917 = vadd.f32 0.0, %v2916
        %2918 = vmatmul.bf16.gmra.mxu0 %v2872
        %v2919 = vpop.f32.mrf.mxu0
        %v2920 = vadd.f32 0.0, %v2919
        %v2921 = vpop.f32.mrf.mxu0
        %v2922 = vadd.f32 0.0, %v2921
        %2923 = vmatmul.bf16.gmra.mxu0 %v2875
        %v2924 = vpop.f32.mrf.mxu0
        %v2925 = vadd.f32 0.0, %v2924
        %v2926 = vpop.f32.mrf.mxu0
        %v2927 = vadd.f32 0.0, %v2926
        %2928 = vdwg.mxu0
        %v2929 = vadd.f32 %v2302, %v2890
        %v2930 = vadd.f32 %v2303, %v2892
        %v2931 = vadd.f32 %v2304, %v2895
        %v2932 = vadd.f32 %v2305, %v2897
        %v2933 = vadd.f32 %v2306, %v2900
        %v2934 = vadd.f32 %v2307, %v2902
        %v2935 = vadd.f32 %v2308, %v2905
        %v2936 = vadd.f32 %v2309, %v2907
        %v2937 = vadd.f32 %v2310, %v2910
        %v2938 = vadd.f32 %v2311, %v2912
        %v2939 = vadd.f32 %v2312, %v2915
        %v2940 = vadd.f32 %v2313, %v2917
        %v2941 = vadd.f32 %v2314, %v2920
        %v2942 = vadd.f32 %v2315, %v2922
        %v2943 = vadd.f32 %v2316, %v2925
        %v2944 = vadd.f32 %v2317, %v2927
        %v2945 = vld [vmem:[%s4] sm:$0x1]
        %v2947 = vperm.slane %v2945, 0
        %v2949 = vadd.f32 %v2929, %v2947
        %v2950 = vadd.f32 %v2930, %v2947
        %v2951 = vadd.f32 %v2931, %v2947
        %v2952 = vadd.f32 %v2932, %v2947
        %v2953 = vadd.f32 %v2933, %v2947
        %v2954 = vadd.f32 %v2934, %v2947
        %v2955 = vadd.f32 %v2935, %v2947
        %v2956 = vadd.f32 %v2936, %v2947
        %v2957 = vadd.f32 %v2937, %v2947
        %v2958 = vadd.f32 %v2938, %v2947
        %v2959 = vadd.f32 %v2939, %v2947
        %v2960 = vadd.f32 %v2940, %v2947
        %v2961 = vadd.f32 %v2941, %v2947
        %v2962 = vadd.f32 %v2942, %v2947
        %v2963 = vadd.f32 %v2943, %v2947
        %v2964 = vadd.f32 %v2944, %v2947
        %2965 = vst.msk [vmem:[%s275] sm:$0xff] %vm354, %v2949
        %2966 = vst.msk [vmem:[%s275 + $0x8] sm:$0xff] %vm354, %v2950
        %2967 = vst.msk [vmem:[%s275 + $0x10] sm:$0xff] %vm354, %v2951
        %2968 = vst.msk [vmem:[%s275 + $0x18] sm:$0xff] %vm354, %v2952
        %2969 = vst.msk [vmem:[%s275 + $0x20] sm:$0xff] %vm354, %v2953
        %2970 = vst.msk [vmem:[%s275 + $0x28] sm:$0xff] %vm354, %v2954
        %2971 = vst.msk [vmem:[%s275 + $0x30] sm:$0xff] %vm354, %v2955
        %2972 = vst.msk [vmem:[%s275 + $0x38] sm:$0xff] %vm354, %v2956
        %2973 = vst.msk [vmem:[%s275 + $0x40] sm:$0xff] %vm354, %v2957
        %2974 = vst.msk [vmem:[%s275 + $0x48] sm:$0xff] %vm354, %v2958
        %2975 = vst.msk [vmem:[%s275 + $0x50] sm:$0xff] %vm354, %v2959
        %2976 = vst.msk [vmem:[%s275 + $0x58] sm:$0xff] %vm354, %v2960
        %2977 = vst.msk [vmem:[%s275 + $0x60] sm:$0xff] %vm354, %v2961
        %2978 = vst.msk [vmem:[%s275 + $0x68] sm:$0xff] %vm354, %v2962
        %2979 = vst.msk [vmem:[%s275 + $0x70] sm:$0xff] %vm354, %v2963
        %2980 = vst.msk [vmem:[%s275 + $0x78] sm:$0xff] %vm354, %v2964
        %s2981 = smul.u32 2, %s18
        %p2982 = scmp.lt.s32.totalorder %s2981, 3
        %s2983 = scalar_select %p2982, %s2981, 3
        %s2984 = smul.addr %s2983, 8
        %s2985 = smul.addr %s2984, 8
        %s2986 = scalar_lea.vmem %s6, %s2985
        // Predicated region
        $region49: #{tpu_custom_call.1} parent=43 // pred_check
          %p2987 = pneg %p167
        $region50: #{tpu_custom_call.1} parent=43 // pred_check_branch
          %2989 = sbr.rel (%p2987) target = $region52
        $region51: #{tpu_custom_call.1} parent=43 // pred_region
          %s2990 = smul.u32 2, %s18
        $region52: #{tpu_custom_call.1} parent=43 // pred_fallthru
          _
      $region44: #{tpu_custom_call.1} parent=5 // pred_fallthru
        _
      %p2991 = scmp.le.s32.totalorder 2, %s13
      // Predicated region
      $region53: #{tpu_custom_call.1} parent=5 // pred_check
        %p2992 = pneg %p2991
      $region54: #{tpu_custom_call.1} parent=5 // pred_check_branch
        %2994 = sbr.rel (%p2992) target = $region56
      $region55: #{tpu_custom_call.1} parent=5 // pred_region
        %s2995 = ssub.s32 %s13, 2
        // Predicated region
        $region57: #{tpu_custom_call.1} parent=55 // pred_check
          %p2996 = pneg %p173
        $region58: #{tpu_custom_call.1} parent=55 // pred_check_branch
          %2998 = sbr.rel (%p2996) target = $region60
        $region59: #{tpu_custom_call.1} parent=55 // pred_region
          %s2999 = smul.u32 2, %s19
          %p3000 = scmp.lt.s32.totalorder %s2999, 3
          %s3001 = scalar_select %p3000, %s2999, 3
          %s3002 = smul.addr %s3001, 8
          %s3003 = smul.addr %s3002, 8
          %s3004 = scalar_lea.vmem %s6, %s3003
        $region60: #{tpu_custom_call.1} parent=55 // pred_fallthru
          _
      $region56: #{tpu_custom_call.1} parent=5 // pred_fallthru
        _
    $region6: #{tpu_custom_call.1} parent=1 // loop_footer
      %s17 = sadd.s32 1, %s13
    $region7: #{tpu_custom_call.1} parent=1 // loop_footer_branch
      %12 = sbr.rel target = $region3
    $region8: #{tpu_custom_call.1} parent=1 // loop_exit
      _
    %3005 = vsyncpa [#allocation3], 1
    %s3006 = scalar_lea.sflag [#allocation3], 1
    %3007 = vsyncpa %s3006, 1

</llo_original>
